<compile_context>
chip_gen: v5e
topology: v5e:2x2
jax: 0.10.0
libtpu: 0.0.40
codegen_flags: <defaults>
</compile_context>

<pallas_src>
import jax
import jax.numpy as jnp
from jax.experimental import pallas as pl
from jax.experimental.pallas import tpu as pltpu

EPS = 1e-5
NEG_SLOPE = 0.01
DIMS = [32, 64, 128, 256, 512, 784]          # true module widths
KDIMS = [32, 128, 128, 256, 512, 896]        # kernel widths (lane-padded)
GB_LANES = KDIMS[-1]                         # packed gamma/beta row width


def _stage(h, w, gamma, beta, inv_b):
    """(h @ w) -> BatchNorm1d (two-pass batch stats, bias-free) -> LeakyReLU(0.01)."""
    y = jnp.dot(h.astype(jnp.bfloat16), w,
                preferred_element_type=jnp.float32)            # [B, F] f32 acc
    mean = jnp.sum(y, axis=0, keepdims=True) * inv_b           # [1, F]
    c = y - mean                                               # centered (two-pass)
    var = jnp.sum(c * c, axis=0, keepdims=True) * inv_b        # biased batch var
    scale = gamma * jax.lax.rsqrt(var + EPS)                   # cheap [1,F] work
    y_bn = c * scale + beta
    return jnp.maximum(y_bn, NEG_SLOPE * y_bn)                 # LeakyReLU(0.01)


def decoder_kernel(x_ref, gb_ref,
                   w12_hbm, w3_hbm, w4_hbm, w5_hbm,
                   o_ref,
                   w12_buf, w3_buf, w4_buf, w5_buf,
                   sems):
    hbms = (w12_hbm, w3_hbm, w4_hbm, w5_hbm)
    bufs = (w12_buf, w3_buf, w4_buf, w5_buf)

    # Issue all weight DMAs immediately; stages consume them in order, so
    # w3..w5 traffic hides behind earlier-stage compute + BN reductions.
    copies = []
    for i in range(4):
        cp = pltpu.make_async_copy(hbms[i], bufs[i], sems.at[i])
        cp.start()
        copies.append(cp)

    inv_b = 1.0 / x_ref.shape[0]      # static batch size -> compile-time constant

    def gamma_beta(stage):            # static slices of the packed [10, 896] array
        f = KDIMS[stage + 1]
        g = gb_ref[2 * stage:2 * stage + 1, :f]
        b = gb_ref[2 * stage + 1:2 * stage + 2, :f]
        return g, b

    h = x_ref[...]

    # Stages 1 & 2 share the single [160, 128] weight slab.
    copies[0].wait()
    g, b = gamma_beta(0)
    h = _stage(h, w12_buf[:KDIMS[0], :], g, b, inv_b)          # 32 -> 128
    g, b = gamma_beta(1)
    h = _stage(h, w12_buf[KDIMS[0]:, :], g, b, inv_b)          # 128 -> 128

    # Stages 3-5.
    for i, buf in enumerate((w3_buf, w4_buf, w5_buf)):
        copies[i + 1].wait()
        g, b = gamma_beta(i + 2)
        h = _stage(h, buf[...], g, b, inv_b)

    o_ref[...] = h.astype(o_ref.dtype)


def prepare_kernel_params(params):
    """Cast weights to bf16, drop biases, lane-pad, pack gamma/beta, fuse w1|w2."""
    ws, gb_rows = [], []
    for i, (w, _b, g, be) in enumerate(params):   # bias cancels under training BN
        fin, fout = DIMS[i], DIMS[i + 1]
        kin, kout = KDIMS[i], KDIMS[i + 1]
        w = jnp.pad(w.astype(jnp.bfloat16), ((0, kin - fin), (0, kout - fout)))
        ws.append(w)
        # gamma pad -> 1.0 (value irrelevant on zero columns), beta pad MUST be 0.
        gb_rows.append(jnp.pad(g[0], (0, GB_LANES - fout), constant_values=1.0))
        gb_rows.append(jnp.pad(be[0], (0, GB_LANES - fout)))
    gb = jnp.stack(gb_rows)                                    # [10, 896] f32
    w12 = jnp.concatenate([ws[0], ws[1]], axis=0)              # [160, 128] bf16
    return (gb, w12, ws[2], ws[3], ws[4])


@jax.jit
def decoder_forward(x, kernel_params):
    gb, w12, w3, w4, w5 = kernel_params
    B = x.shape[0]
    vmem_spec = pl.BlockSpec(memory_space=pltpu.MemorySpace.VMEM)
    hbm_spec = pl.BlockSpec(memory_space=pl.ANY)

    matmul_flops = 2 * B * sum(KDIMS[i] * KDIMS[i + 1] for i in range(5))
    weight_bytes = 2 * (w12.size + w3.size + w4.size + w5.size)
    io_bytes = 4 * (x.size + gb.size + B * KDIMS[-1])
    cost = pl.CostEstimate(flops=matmul_flops,
                           transcendentals=sum(KDIMS[1:]),      # rsqrt per feature
                           bytes_accessed=weight_bytes + io_bytes)

    out = pl.pallas_call(
        decoder_kernel,
        out_shape=jax.ShapeDtypeStruct((B, KDIMS[-1]), jnp.float32),
        in_specs=[vmem_spec, vmem_spec] + [hbm_spec] * 4,
        out_specs=vmem_spec,
        scratch_shapes=[
            pltpu.VMEM((KDIMS[0] + KDIMS[1], KDIMS[2]), jnp.bfloat16),  # w1|w2 slab
            pltpu.VMEM((KDIMS[2], KDIMS[3]), jnp.bfloat16),
            pltpu.VMEM((KDIMS[3], KDIMS[4]), jnp.bfloat16),
            pltpu.VMEM((KDIMS[4], KDIMS[5]), jnp.bfloat16),
            pltpu.SemaphoreType.DMA((4,)),
        ],
        compiler_params=pltpu.CompilerParams(vmem_limit_bytes=8 * 1024 * 1024),
        cost_estimate=cost,
    )(x, gb, w12, w3, w4, w5)
    return out[:, :DIMS[-1]]          # drop the 784 -> 896 padding


def init_params(key):
    """Deterministic parameter init mirroring the PyTorch module shapes.

    Linear(in, out): weight stored transposed as [in, out], bias [1, out].
    BatchNorm1d(out): gamma=1, beta=0.
    """
    params = []
    for i in range(len(DIMS) - 1):
        fan_in, fan_out = DIMS[i], DIMS[i + 1]
        key, kw, kb = jax.random.split(key, 3)
        bound = 1.0 / (fan_in ** 0.5)
        w = jax.random.uniform(kw, (fan_in, fan_out), jnp.float32, -bound, bound)
        b = jax.random.uniform(kb, (1, fan_out), jnp.float32, -bound, bound)
        gamma = jnp.ones((1, fan_out), jnp.float32)
        beta = jnp.zeros((1, fan_out), jnp.float32)
        params.append((w, b, gamma, beta))
    return params


def decoder_reference(x, params):
    """Pure-JAX reference with the original module semantics (Linear bias +
    training-mode BatchNorm1d + LeakyReLU), matmuls in the same bf16-in /
    f32-accumulate precision as the kernel so tolerances stay tight."""
    h = x
    for (w, b, g, be) in params:
        y = jnp.dot(h.astype(jnp.bfloat16), w.astype(jnp.bfloat16),
                    preferred_element_type=jnp.float32) + b
        mean = jnp.mean(y, axis=0, keepdims=True)
        var = jnp.mean((y - mean) ** 2, axis=0, keepdims=True)
        y = (y - mean) * jax.lax.rsqrt(var + EPS) * g + be
        h = jnp.where(y > 0, y, NEG_SLOPE * y)
    return h


if __name__ == "__main__":
    key = jax.random.PRNGKey(0)
    key, kx = jax.random.split(key)

    B = 8
    x = jax.random.normal(kx, (B, DIMS[0]), jnp.float32)
    params = init_params(key)
    kernel_params = prepare_kernel_params(params)

    out = decoder_forward(x, kernel_params)
    out = jax.block_until_ready(out)

    ref = decoder_reference(x, params)
    assert out.shape == (B, DIMS[-1]), out.shape
    max_err = float(jnp.max(jnp.abs(out - ref)))
    assert jnp.allclose(out, ref, atol=2e-2, rtol=2e-2), f"mismatch, max_err={max_err}"

    print("KERNEL_OK")
</pallas_src>

<mosaic_0001>
module attributes {stable_mosaic.version = 11 : i64} {
  func.func @decoder_kernel(%arg0: memref<8x32xf32, #tpu.memory_space<vmem>>, %arg1: memref<10x896xf32, #tpu.memory_space<vmem>>, %arg2: memref<160x128xbf16, #tpu.memory_space<any>>, %arg3: memref<128x256xbf16, #tpu.memory_space<any>>, %arg4: memref<256x512xbf16, #tpu.memory_space<any>>, %arg5: memref<512x896xbf16, #tpu.memory_space<any>>, %arg6: memref<8x896xf32, #tpu.memory_space<vmem>>, %arg7: memref<160x128xbf16, #tpu.memory_space<vmem>>, %arg8: memref<128x256xbf16, #tpu.memory_space<vmem>>, %arg9: memref<256x512xbf16, #tpu.memory_space<vmem>>, %arg10: memref<512x896xbf16, #tpu.memory_space<vmem>>, %arg11: memref<4x!tpu.dma_semaphore, #tpu.memory_space<semaphore_mem>>) attributes {dimension_semantics = [], scalar_prefetch = 0 : i64, scratch_operands = 5 : i64, tpu.core_type = #tpu.core_type<tc>} {
    %c0_i32 = arith.constant 0 : i32
    %0 = tpu.memref_slice %arg11[%c0_i32] : memref<4x!tpu.dma_semaphore, #tpu.memory_space<semaphore_mem>> -> memref<1x!tpu.dma_semaphore, #tpu.memory_space<semaphore_mem>>
    %1 = tpu.memref_squeeze %0 : memref<1x!tpu.dma_semaphore, #tpu.memory_space<semaphore_mem>> -> memref<!tpu.dma_semaphore, #tpu.memory_space<semaphore_mem>>
    tpu.enqueue_dma source(%arg2 : memref<160x128xbf16, #tpu.memory_space<any>>) target(%arg7 : memref<160x128xbf16, #tpu.memory_space<vmem>>) target_semaphore(%1 : memref<!tpu.dma_semaphore, #tpu.memory_space<semaphore_mem>>)
    %c1_i32 = arith.constant 1 : i32
    %2 = tpu.memref_slice %arg11[%c1_i32] : memref<4x!tpu.dma_semaphore, #tpu.memory_space<semaphore_mem>> -> memref<1x!tpu.dma_semaphore, #tpu.memory_space<semaphore_mem>>
    %3 = tpu.memref_squeeze %2 : memref<1x!tpu.dma_semaphore, #tpu.memory_space<semaphore_mem>> -> memref<!tpu.dma_semaphore, #tpu.memory_space<semaphore_mem>>
    tpu.enqueue_dma source(%arg3 : memref<128x256xbf16, #tpu.memory_space<any>>) target(%arg8 : memref<128x256xbf16, #tpu.memory_space<vmem>>) target_semaphore(%3 : memref<!tpu.dma_semaphore, #tpu.memory_space<semaphore_mem>>)
    %c2_i32 = arith.constant 2 : i32
    %4 = tpu.memref_slice %arg11[%c2_i32] : memref<4x!tpu.dma_semaphore, #tpu.memory_space<semaphore_mem>> -> memref<1x!tpu.dma_semaphore, #tpu.memory_space<semaphore_mem>>
    %5 = tpu.memref_squeeze %4 : memref<1x!tpu.dma_semaphore, #tpu.memory_space<semaphore_mem>> -> memref<!tpu.dma_semaphore, #tpu.memory_space<semaphore_mem>>
    tpu.enqueue_dma source(%arg4 : memref<256x512xbf16, #tpu.memory_space<any>>) target(%arg9 : memref<256x512xbf16, #tpu.memory_space<vmem>>) target_semaphore(%5 : memref<!tpu.dma_semaphore, #tpu.memory_space<semaphore_mem>>)
    %c3_i32 = arith.constant 3 : i32
    %6 = tpu.memref_slice %arg11[%c3_i32] : memref<4x!tpu.dma_semaphore, #tpu.memory_space<semaphore_mem>> -> memref<1x!tpu.dma_semaphore, #tpu.memory_space<semaphore_mem>>
    %7 = tpu.memref_squeeze %6 : memref<1x!tpu.dma_semaphore, #tpu.memory_space<semaphore_mem>> -> memref<!tpu.dma_semaphore, #tpu.memory_space<semaphore_mem>>
    tpu.enqueue_dma source(%arg5 : memref<512x896xbf16, #tpu.memory_space<any>>) target(%arg10 : memref<512x896xbf16, #tpu.memory_space<vmem>>) target_semaphore(%7 : memref<!tpu.dma_semaphore, #tpu.memory_space<semaphore_mem>>)
    %c0 = arith.constant 0 : index
    %c0_0 = arith.constant 0 : index
    %8 = vector.load %arg0[%c0, %c0_0] : memref<8x32xf32, #tpu.memory_space<vmem>>, vector<8x32xf32>
    %c0_i32_1 = arith.constant 0 : i32
    %9 = tpu.memref_slice %arg11[%c0_i32_1] : memref<4x!tpu.dma_semaphore, #tpu.memory_space<semaphore_mem>> -> memref<1x!tpu.dma_semaphore, #tpu.memory_space<semaphore_mem>>
    %10 = tpu.memref_squeeze %9 : memref<1x!tpu.dma_semaphore, #tpu.memory_space<semaphore_mem>> -> memref<!tpu.dma_semaphore, #tpu.memory_space<semaphore_mem>>
    tpu.wait_dma2 semaphore(%10 : memref<!tpu.dma_semaphore, #tpu.memory_space<semaphore_mem>>) src(%arg2 : memref<160x128xbf16, #tpu.memory_space<any>>) dst(%arg7 : memref<160x128xbf16, #tpu.memory_space<vmem>>)
    %c0_2 = arith.constant 0 : index
    %c0_3 = arith.constant 0 : index
    %11 = vector.load %arg1[%c0_2, %c0_3] : memref<10x896xf32, #tpu.memory_space<vmem>>, vector<1x128xf32>
    %c1 = arith.constant 1 : index
    %c0_4 = arith.constant 0 : index
    %12 = vector.load %arg1[%c1, %c0_4] : memref<10x896xf32, #tpu.memory_space<vmem>>, vector<1x128xf32>
    %c0_5 = arith.constant 0 : index
    %c0_6 = arith.constant 0 : index
    %13 = vector.load %arg7[%c0_5, %c0_6] : memref<160x128xbf16, #tpu.memory_space<vmem>>, vector<32x128xbf16>
    %14 = arith.truncf %8 : vector<8x32xf32> to vector<8x32xbf16>
    %cst = arith.constant dense<0.000000e+00> : vector<8x128xf32>
    %15 = tpu.matmul %14, %13, %cst {dimension_numbers = #tpu.dot_dimension_numbers<[1], [0], [0], [1], [0, 0, 1, 1], [], []>} : vector<8x32xbf16>, vector<32x128xbf16>, vector<8x128xf32> -> vector<8x128xf32>
    %cst_7 = arith.constant dense<0.000000e+00> : vector<128xf32>
    %16 = vector.multi_reduction <add>, %15, %cst_7 [0] : vector<8x128xf32> to vector<128xf32>
    %17 = vector.shape_cast %16 : vector<128xf32> to vector<1x128xf32>
    %cst_8 = arith.constant 1.250000e-01 : f32
    %18 = vector.broadcast %cst_8 : f32 to vector<1x128xf32>
    %19 = arith.mulf %17, %18 : vector<1x128xf32>
    %20 = vector.broadcast %19 : vector<1x128xf32> to vector<8x128xf32>
    %21 = arith.subf %15, %20 : vector<8x128xf32>
    %22 = arith.mulf %21, %21 : vector<8x128xf32>
    %cst_9 = arith.constant dense<0.000000e+00> : vector<128xf32>
    %23 = vector.multi_reduction <add>, %22, %cst_9 [0] : vector<8x128xf32> to vector<128xf32>
    %24 = vector.shape_cast %23 : vector<128xf32> to vector<1x128xf32>
    %cst_10 = arith.constant 1.250000e-01 : f32
    %25 = vector.broadcast %cst_10 : f32 to vector<1x128xf32>
    %26 = arith.mulf %24, %25 : vector<1x128xf32>
    %cst_11 = arith.constant 9.99999974E-6 : f32
    %27 = vector.broadcast %cst_11 : f32 to vector<1x128xf32>
    %28 = arith.addf %26, %27 : vector<1x128xf32>
    %29 = math.rsqrt %28 : vector<1x128xf32>
    %30 = arith.mulf %11, %29 : vector<1x128xf32>
    %31 = vector.broadcast %30 : vector<1x128xf32> to vector<8x128xf32>
    %32 = arith.mulf %21, %31 : vector<8x128xf32>
    %33 = vector.broadcast %12 : vector<1x128xf32> to vector<8x128xf32>
    %34 = arith.addf %32, %33 : vector<8x128xf32>
    %cst_12 = arith.constant 0.00999999977 : f32
    %35 = vector.broadcast %cst_12 : f32 to vector<8x128xf32>
    %36 = arith.mulf %35, %34 : vector<8x128xf32>
    %37 = arith.maximumf %34, %36 : vector<8x128xf32>
    %c2 = arith.constant 2 : index
    %c0_13 = arith.constant 0 : index
    %38 = vector.load %arg1[%c2, %c0_13] : memref<10x896xf32, #tpu.memory_space<vmem>>, vector<1x128xf32>
    %c3 = arith.constant 3 : index
    %c0_14 = arith.constant 0 : index
    %39 = vector.load %arg1[%c3, %c0_14] : memref<10x896xf32, #tpu.memory_space<vmem>>, vector<1x128xf32>
    %c32 = arith.constant 32 : index
    %c0_15 = arith.constant 0 : index
    %40 = vector.load %arg7[%c32, %c0_15] : memref<160x128xbf16, #tpu.memory_space<vmem>>, vector<128x128xbf16>
    %41 = arith.truncf %37 : vector<8x128xf32> to vector<8x128xbf16>
    %cst_16 = arith.constant dense<0.000000e+00> : vector<8x128xf32>
    %42 = tpu.matmul %41, %40, %cst_16 {dimension_numbers = #tpu.dot_dimension_numbers<[1], [0], [0], [1], [0, 0, 1, 1], [], []>} : vector<8x128xbf16>, vector<128x128xbf16>, vector<8x128xf32> -> vector<8x128xf32>
    %cst_17 = arith.constant dense<0.000000e+00> : vector<128xf32>
    %43 = vector.multi_reduction <add>, %42, %cst_17 [0] : vector<8x128xf32> to vector<128xf32>
    %44 = vector.shape_cast %43 : vector<128xf32> to vector<1x128xf32>
    %cst_18 = arith.constant 1.250000e-01 : f32
    %45 = vector.broadcast %cst_18 : f32 to vector<1x128xf32>
    %46 = arith.mulf %44, %45 : vector<1x128xf32>
    %47 = vector.broadcast %46 : vector<1x128xf32> to vector<8x128xf32>
    %48 = arith.subf %42, %47 : vector<8x128xf32>
    %49 = arith.mulf %48, %48 : vector<8x128xf32>
    %cst_19 = arith.constant dense<0.000000e+00> : vector<128xf32>
    %50 = vector.multi_reduction <add>, %49, %cst_19 [0] : vector<8x128xf32> to vector<128xf32>
    %51 = vector.shape_cast %50 : vector<128xf32> to vector<1x128xf32>
    %cst_20 = arith.constant 1.250000e-01 : f32
    %52 = vector.broadcast %cst_20 : f32 to vector<1x128xf32>
    %53 = arith.mulf %51, %52 : vector<1x128xf32>
    %cst_21 = arith.constant 9.99999974E-6 : f32
    %54 = vector.broadcast %cst_21 : f32 to vector<1x128xf32>
    %55 = arith.addf %53, %54 : vector<1x128xf32>
    %56 = math.rsqrt %55 : vector<1x128xf32>
    %57 = arith.mulf %38, %56 : vector<1x128xf32>
    %58 = vector.broadcast %57 : vector<1x128xf32> to vector<8x128xf32>
    %59 = arith.mulf %48, %58 : vector<8x128xf32>
    %60 = vector.broadcast %39 : vector<1x128xf32> to vector<8x128xf32>
    %61 = arith.addf %59, %60 : vector<8x128xf32>
    %cst_22 = arith.constant 0.00999999977 : f32
    %62 = vector.broadcast %cst_22 : f32 to vector<8x128xf32>
    %63 = arith.mulf %62, %61 : vector<8x128xf32>
    %64 = arith.maximumf %61, %63 : vector<8x128xf32>
    %c1_i32_23 = arith.constant 1 : i32
    %65 = tpu.memref_slice %arg11[%c1_i32_23] : memref<4x!tpu.dma_semaphore, #tpu.memory_space<semaphore_mem>> -> memref<1x!tpu.dma_semaphore, #tpu.memory_space<semaphore_mem>>
    %66 = tpu.memref_squeeze %65 : memref<1x!tpu.dma_semaphore, #tpu.memory_space<semaphore_mem>> -> memref<!tpu.dma_semaphore, #tpu.memory_space<semaphore_mem>>
    tpu.wait_dma2 semaphore(%66 : memref<!tpu.dma_semaphore, #tpu.memory_space<semaphore_mem>>) src(%arg3 : memref<128x256xbf16, #tpu.memory_space<any>>) dst(%arg8 : memref<128x256xbf16, #tpu.memory_space<vmem>>)
    %c4 = arith.constant 4 : index
    %c0_24 = arith.constant 0 : index
    %67 = vector.load %arg1[%c4, %c0_24] : memref<10x896xf32, #tpu.memory_space<vmem>>, vector<1x256xf32>
    %c5 = arith.constant 5 : index
    %c0_25 = arith.constant 0 : index
    %68 = vector.load %arg1[%c5, %c0_25] : memref<10x896xf32, #tpu.memory_space<vmem>>, vector<1x256xf32>
    %c0_26 = arith.constant 0 : index
    %c0_27 = arith.constant 0 : index
    %69 = vector.load %arg8[%c0_26, %c0_27] : memref<128x256xbf16, #tpu.memory_space<vmem>>, vector<128x256xbf16>
    %70 = arith.truncf %64 : vector<8x128xf32> to vector<8x128xbf16>
    %cst_28 = arith.constant dense<0.000000e+00> : vector<8x256xf32>
    %71 = tpu.matmul %70, %69, %cst_28 {dimension_numbers = #tpu.dot_dimension_numbers<[1], [0], [0], [1], [0, 0, 1, 1], [], []>} : vector<8x128xbf16>, vector<128x256xbf16>, vector<8x256xf32> -> vector<8x256xf32>
    %cst_29 = arith.constant dense<0.000000e+00> : vector<256xf32>
    %72 = vector.multi_reduction <add>, %71, %cst_29 [0] : vector<8x256xf32> to vector<256xf32>
    %73 = vector.shape_cast %72 : vector<256xf32> to vector<1x256xf32>
    %cst_30 = arith.constant 1.250000e-01 : f32
    %74 = vector.broadcast %cst_30 : f32 to vector<1x256xf32>
    %75 = arith.mulf %73, %74 : vector<1x256xf32>
    %76 = vector.broadcast %75 : vector<1x256xf32> to vector<8x256xf32>
    %77 = arith.subf %71, %76 : vector<8x256xf32>
    %78 = arith.mulf %77, %77 : vector<8x256xf32>
    %cst_31 = arith.constant dense<0.000000e+00> : vector<256xf32>
    %79 = vector.multi_reduction <add>, %78, %cst_31 [0] : vector<8x256xf32> to vector<256xf32>
    %80 = vector.shape_cast %79 : vector<256xf32> to vector<1x256xf32>
    %cst_32 = arith.constant 1.250000e-01 : f32
    %81 = vector.broadcast %cst_32 : f32 to vector<1x256xf32>
    %82 = arith.mulf %80, %81 : vector<1x256xf32>
    %cst_33 = arith.constant 9.99999974E-6 : f32
    %83 = vector.broadcast %cst_33 : f32 to vector<1x256xf32>
    %84 = arith.addf %82, %83 : vector<1x256xf32>
    %85 = math.rsqrt %84 : vector<1x256xf32>
    %86 = arith.mulf %67, %85 : vector<1x256xf32>
    %87 = vector.broadcast %86 : vector<1x256xf32> to vector<8x256xf32>
    %88 = arith.mulf %77, %87 : vector<8x256xf32>
    %89 = vector.broadcast %68 : vector<1x256xf32> to vector<8x256xf32>
    %90 = arith.addf %88, %89 : vector<8x256xf32>
    %cst_34 = arith.constant 0.00999999977 : f32
    %91 = vector.broadcast %cst_34 : f32 to vector<8x256xf32>
    %92 = arith.mulf %91, %90 : vector<8x256xf32>
    %93 = arith.maximumf %90, %92 : vector<8x256xf32>
    %c2_i32_35 = arith.constant 2 : i32
    %94 = tpu.memref_slice %arg11[%c2_i32_35] : memref<4x!tpu.dma_semaphore, #tpu.memory_space<semaphore_mem>> -> memref<1x!tpu.dma_semaphore, #tpu.memory_space<semaphore_mem>>
    %95 = tpu.memref_squeeze %94 : memref<1x!tpu.dma_semaphore, #tpu.memory_space<semaphore_mem>> -> memref<!tpu.dma_semaphore, #tpu.memory_space<semaphore_mem>>
    tpu.wait_dma2 semaphore(%95 : memref<!tpu.dma_semaphore, #tpu.memory_space<semaphore_mem>>) src(%arg4 : memref<256x512xbf16, #tpu.memory_space<any>>) dst(%arg9 : memref<256x512xbf16, #tpu.memory_space<vmem>>)
    %c6 = arith.constant 6 : index
    %c0_36 = arith.constant 0 : index
    %96 = vector.load %arg1[%c6, %c0_36] : memref<10x896xf32, #tpu.memory_space<vmem>>, vector<1x512xf32>
    %c7 = arith.constant 7 : index
    %c0_37 = arith.constant 0 : index
    %97 = vector.load %arg1[%c7, %c0_37] : memref<10x896xf32, #tpu.memory_space<vmem>>, vector<1x512xf32>
    %c0_38 = arith.constant 0 : index
    %c0_39 = arith.constant 0 : index
    %98 = vector.load %arg9[%c0_38, %c0_39] : memref<256x512xbf16, #tpu.memory_space<vmem>>, vector<256x512xbf16>
    %99 = arith.truncf %93 : vector<8x256xf32> to vector<8x256xbf16>
    %cst_40 = arith.constant dense<0.000000e+00> : vector<8x512xf32>
    %100 = tpu.matmul %99, %98, %cst_40 {dimension_numbers = #tpu.dot_dimension_numbers<[1], [0], [0], [1], [0, 0, 1, 1], [], []>} : vector<8x256xbf16>, vector<256x512xbf16>, vector<8x512xf32> -> vector<8x512xf32>
    %cst_41 = arith.constant dense<0.000000e+00> : vector<512xf32>
    %101 = vector.multi_reduction <add>, %100, %cst_41 [0] : vector<8x512xf32> to vector<512xf32>
    %102 = vector.shape_cast %101 : vector<512xf32> to vector<1x512xf32>
    %cst_42 = arith.constant 1.250000e-01 : f32
    %103 = vector.broadcast %cst_42 : f32 to vector<1x512xf32>
    %104 = arith.mulf %102, %103 : vector<1x512xf32>
    %105 = vector.broadcast %104 : vector<1x512xf32> to vector<8x512xf32>
    %106 = arith.subf %100, %105 : vector<8x512xf32>
    %107 = arith.mulf %106, %106 : vector<8x512xf32>
    %cst_43 = arith.constant dense<0.000000e+00> : vector<512xf32>
    %108 = vector.multi_reduction <add>, %107, %cst_43 [0] : vector<8x512xf32> to vector<512xf32>
    %109 = vector.shape_cast %108 : vector<512xf32> to vector<1x512xf32>
    %cst_44 = arith.constant 1.250000e-01 : f32
    %110 = vector.broadcast %cst_44 : f32 to vector<1x512xf32>
    %111 = arith.mulf %109, %110 : vector<1x512xf32>
    %cst_45 = arith.constant 9.99999974E-6 : f32
    %112 = vector.broadcast %cst_45 : f32 to vector<1x512xf32>
    %113 = arith.addf %111, %112 : vector<1x512xf32>
    %114 = math.rsqrt %113 : vector<1x512xf32>
    %115 = arith.mulf %96, %114 : vector<1x512xf32>
    %116 = vector.broadcast %115 : vector<1x512xf32> to vector<8x512xf32>
    %117 = arith.mulf %106, %116 : vector<8x512xf32>
    %118 = vector.broadcast %97 : vector<1x512xf32> to vector<8x512xf32>
    %119 = arith.addf %117, %118 : vector<8x512xf32>
    %cst_46 = arith.constant 0.00999999977 : f32
    %120 = vector.broadcast %cst_46 : f32 to vector<8x512xf32>
    %121 = arith.mulf %120, %119 : vector<8x512xf32>
    %122 = arith.maximumf %119, %121 : vector<8x512xf32>
    %c3_i32_47 = arith.constant 3 : i32
    %123 = tpu.memref_slice %arg11[%c3_i32_47] : memref<4x!tpu.dma_semaphore, #tpu.memory_space<semaphore_mem>> -> memref<1x!tpu.dma_semaphore, #tpu.memory_space<semaphore_mem>>
    %124 = tpu.memref_squeeze %123 : memref<1x!tpu.dma_semaphore, #tpu.memory_space<semaphore_mem>> -> memref<!tpu.dma_semaphore, #tpu.memory_space<semaphore_mem>>
    tpu.wait_dma2 semaphore(%124 : memref<!tpu.dma_semaphore, #tpu.memory_space<semaphore_mem>>) src(%arg5 : memref<512x896xbf16, #tpu.memory_space<any>>) dst(%arg10 : memref<512x896xbf16, #tpu.memory_space<vmem>>)
    %c8 = arith.constant 8 : index
    %c0_48 = arith.constant 0 : index
    %125 = vector.load %arg1[%c8, %c0_48] : memref<10x896xf32, #tpu.memory_space<vmem>>, vector<1x896xf32>
    %c9 = arith.constant 9 : index
    %c0_49 = arith.constant 0 : index
    %126 = vector.load %arg1[%c9, %c0_49] : memref<10x896xf32, #tpu.memory_space<vmem>>, vector<1x896xf32>
    %c0_50 = arith.constant 0 : index
    %c0_51 = arith.constant 0 : index
    %127 = vector.load %arg10[%c0_50, %c0_51] : memref<512x896xbf16, #tpu.memory_space<vmem>>, vector<512x896xbf16>
    %128 = arith.truncf %122 : vector<8x512xf32> to vector<8x512xbf16>
    %cst_52 = arith.constant dense<0.000000e+00> : vector<8x896xf32>
    %129 = tpu.matmul %128, %127, %cst_52 {dimension_numbers = #tpu.dot_dimension_numbers<[1], [0], [0], [1], [0, 0, 1, 1], [], []>} : vector<8x512xbf16>, vector<512x896xbf16>, vector<8x896xf32> -> vector<8x896xf32>
    %cst_53 = arith.constant dense<0.000000e+00> : vector<896xf32>
    %130 = vector.multi_reduction <add>, %129, %cst_53 [0] : vector<8x896xf32> to vector<896xf32>
    %131 = vector.shape_cast %130 : vector<896xf32> to vector<1x896xf32>
    %cst_54 = arith.constant 1.250000e-01 : f32
    %132 = vector.broadcast %cst_54 : f32 to vector<1x896xf32>
    %133 = arith.mulf %131, %132 : vector<1x896xf32>
    %134 = vector.broadcast %133 : vector<1x896xf32> to vector<8x896xf32>
    %135 = arith.subf %129, %134 : vector<8x896xf32>
    %136 = arith.mulf %135, %135 : vector<8x896xf32>
    %cst_55 = arith.constant dense<0.000000e+00> : vector<896xf32>
    %137 = vector.multi_reduction <add>, %136, %cst_55 [0] : vector<8x896xf32> to vector<896xf32>
    %138 = vector.shape_cast %137 : vector<896xf32> to vector<1x896xf32>
    %cst_56 = arith.constant 1.250000e-01 : f32
    %139 = vector.broadcast %cst_56 : f32 to vector<1x896xf32>
    %140 = arith.mulf %138, %139 : vector<1x896xf32>
    %cst_57 = arith.constant 9.99999974E-6 : f32
    %141 = vector.broadcast %cst_57 : f32 to vector<1x896xf32>
    %142 = arith.addf %140, %141 : vector<1x896xf32>
    %143 = math.rsqrt %142 : vector<1x896xf32>
    %144 = arith.mulf %125, %143 : vector<1x896xf32>
    %145 = vector.broadcast %144 : vector<1x896xf32> to vector<8x896xf32>
    %146 = arith.mulf %135, %145 : vector<8x896xf32>
    %147 = vector.broadcast %126 : vector<1x896xf32> to vector<8x896xf32>
    %148 = arith.addf %146, %147 : vector<8x896xf32>
    %cst_58 = arith.constant 0.00999999977 : f32
    %149 = vector.broadcast %cst_58 : f32 to vector<8x896xf32>
    %150 = arith.mulf %149, %148 : vector<8x896xf32>
    %151 = arith.maximumf %148, %150 : vector<8x896xf32>
    %c0_59 = arith.constant 0 : index
    %c0_60 = arith.constant 0 : index
    %152 = vector.load %arg6[%c0_59, %c0_60] : memref<8x896xf32, #tpu.memory_space<vmem>>, vector<8x896xf32>
    tpu.vector_store %arg6[%c0_59, %c0_60], %151 {strides = array<i32>} : memref<8x896xf32, #tpu.memory_space<vmem>>, vector<8x896xf32>,
    return
  }
}

</mosaic_0001>

<llo_original>
// kernel: decoder_forward.1
$region0: #{decoder_forward.1}
  #allocation0 [shape = 'u32[]', space=smem, size = 0x4, offset = 0x4, fixed_abs, tag = 'smem constant byte address 0x4 - core index']
  #allocation1 [shape = 'u32[72,128]{1,0:T(1,128)}', space=vmem, size = 0x9000, scoped, tag = 'internal scratch']
  #allocation2 [shape = 'bf16[160,128]{1,0:T(8,128)(2,1)}', space=vmem, size = 0xa000, scoped, tag = 'scratch operand']
  #allocation3 [shape = 'bf16[128,256]{1,0:T(8,128)(2,1)}', space=vmem, size = 0x10000, scoped, tag = 'scratch operand']
  #allocation4 [shape = 'bf16[256,512]{1,0:T(8,128)(2,1)}', space=vmem, size = 0x40000, scoped, tag = 'scratch operand']
  #allocation5 [shape = 'bf16[512,896]{1,0:T(8,128)(2,1)}', space=vmem, size = 0xe0000, scoped, tag = 'scratch operand']
  #allocation6 [shape = 's32[4]{0}', space=sflag, size = 0x10, scoped, tag = 'scratch operand']
  #allocation13 [shape = 's32[]', space=sflag, size = 0x4, offset = 0, fixed_abs, tag = 'sflag constant byte address 0x0 - dummy sync flag']
  #allocation14 [shape = 's32[]', space=sflag, size = 0x4, offset = 0, fixed_abs, tag = 'sflag constant byte address 0x0 - dummy sync flag']
  #allocation15 [shape = 'u32[]', space=smem, size = 0x4, offset = 0x44, fixed_abs, tag = 'smem constant byte address 0x44 - assertion arg 0']
  #allocation16 [shape = 'u32[]', space=smem, size = 0x4, offset = 0x48, fixed_abs, tag = 'smem constant byte address 0x48 - assertion arg 1']
  #allocation17 [shape = 's32[]', space=sflag, size = 0x4, offset = 0, fixed_abs, tag = 'sflag constant byte address 0x0 - dummy sync flag']
  #allocation18 [shape = 's32[]', space=sflag, size = 0x4, offset = 0, fixed_abs, tag = 'sflag constant byte address 0x0 - dummy sync flag']
  #allocation19 [shape = 's32[]', space=sflag, size = 0x4, offset = 0, fixed_abs, tag = 'sflag constant byte address 0x0 - dummy sync flag']
  #allocation20 [shape = 's32[]', space=sflag, size = 0x4, offset = 0, fixed_abs, tag = 'sflag constant byte address 0x0 - dummy sync flag']
  #allocation21 [shape = 's32[]', space=sflag, size = 0x4, offset = 0, fixed_abs, tag = 'sflag constant byte address 0x0 - dummy sync flag']
  #allocation22 [shape = 's32[]', space=sflag, size = 0x4, offset = 0, fixed_abs, tag = 'sflag constant byte address 0x0 - dummy sync flag']
  %s0 = inlined_call_operand.hbm [shape: f32[8,32], index: 0, kind: input, shape index: {}]
  %s1 = inlined_call_operand.hbm [shape: f32[10,896], index: 1, kind: input, shape index: {}]
  %s2 = inlined_call_operand.hbm [shape: bf16[160,128], index: 2, kind: input, shape index: {}]
  %s3 = inlined_call_operand.hbm [shape: bf16[128,256], index: 3, kind: input, shape index: {}]
  %s4 = inlined_call_operand.hbm [shape: bf16[256,512], index: 4, kind: input, shape index: {}]
  %s5 = inlined_call_operand.hbm [shape: bf16[512,896], index: 5, kind: input, shape index: {}]
  %s6 = inlined_call_operand.hbm [shape: f32[8,896], index: 6, kind: output, shape index: {}]
  %s7 = sld [smem:[#allocation0]]
  $region42: #{decoder_forward.1} parent=0
    _
  %s9 = ssub.s32 1, %s7
  %s10 = scalar_select 0, %s9, %s7
  $region1: #{decoder_forward.1} parent=0
    #allocation7 [shape = 'u8[4096]{0}', space=vmem, size = 0x1000, scoped, tag = 'input window, operand 0, single buffered']
    #allocation8 [shape = 's32[1]{0}', space=sflag, size = 0x4, scoped, tag = 'scoped memory for decoder_forward.1']
    #allocation9 [shape = 's32[1]{0}', space=sflag, size = 0x4, scoped, tag = 'scoped memory for decoder_forward.1']
    #allocation10 [shape = 'u8[57344]{0}', space=vmem, size = 0xe000, scoped, tag = 'input window, operand 1, single buffered']
    #allocation11 [shape = 's32[1]{0}', space=sflag, size = 0x4, scoped, tag = 'scoped memory for decoder_forward.1']
    #allocation12 [shape = 'u8[28672]{0}', space=vmem, size = 0x7000, scoped, tag = 'output window, operand 0, single buffered']
    %11 = vsyncpa [#allocation8], 0
    %12 = vsyncpa [#allocation11], 0
    %13 = vsyncpa [#allocation9], 0
    // Predicated region
    $region2: #{decoder_forward.1} parent=1 // pred_check
      _
    $region3: #{decoder_forward.1} parent=1 // pred_check_branch
      %15 = sbr.rel (0) target = $region5
    $region4: #{decoder_forward.1} parent=1 // pred_region
      %17 = vsyncadd [#allocation8], 0
      %s19 = sshll.u32 %s0, 4
      %s20 = int_to_ptr.hbm [resolvable:$true] %s19
      %s21 = sshll.u32 [#allocation7], 4
      %s22 = int_to_ptr.vmem [resolvable:$true] %s21
      %24 = dma.hbm_to_vmem [thread:$0]  %s20, 128, %s22, [#allocation8]
    $region5: #{decoder_forward.1} parent=1 // pred_fallthru
      _
    // Predicated region
    $region6: #{decoder_forward.1} parent=1 // pred_check
      _
    $region7: #{decoder_forward.1} parent=1 // pred_check_branch
      %26 = sbr.rel (0) target = $region9
    $region8: #{decoder_forward.1} parent=1 // pred_region
      %28 = vsyncadd [#allocation11], 0
      %s29 = sshll.u32 %s1, 4
      %s30 = int_to_ptr.hbm [resolvable:$true] %s29
      %s31 = sshll.u32 [#allocation10], 4
      %s32 = int_to_ptr.vmem [resolvable:$true] %s31
      %37 = dma.hbm_to_vmem [thread:$0]  %s30, 1792, %s32, [#allocation11], 896, 896, 56
    $region9: #{decoder_forward.1} parent=1 // pred_fallthru
      _
    // Predicated region
    $region10: #{decoder_forward.1} parent=1 // pred_check
      _
    $region11: #{decoder_forward.1} parent=1 // pred_check_branch
      %39 = sbr.rel (0) target = $region13
    $region12: #{decoder_forward.1} parent=1 // pred_region
      %41 = dma.done [#allocation8], 128
    $region13: #{decoder_forward.1} parent=1 // pred_fallthru
      _
    // Predicated region
    $region14: #{decoder_forward.1} parent=1 // pred_check
      _
    $region15: #{decoder_forward.1} parent=1 // pred_check_branch
      %43 = sbr.rel (0) target = $region17
    $region16: #{decoder_forward.1} parent=1 // pred_region
      %45 = dma.done [#allocation11], 1792
    $region17: #{decoder_forward.1} parent=1 // pred_fallthru
      _
    // Predicated region
    $region18: #{decoder_forward.1} parent=1 // pred_check
      _
    $region19: #{decoder_forward.1} parent=1 // pred_check_branch
      %48 = sbr.rel target = $region21
    $region20: #{decoder_forward.1} parent=1 // pred_region
      %49 = sst [smem:[#allocation15]] [#allocation14]
      %50 = sst [smem:[#allocation16]] [#allocation13]
    $region21: #{decoder_forward.1} parent=1 // pred_fallthru
      _
    %52 = shalt.err (0)
    %s54 = sshll.u32 %s2, 4
    %s55 = int_to_ptr.hbm [resolvable:$true] %s54
    %s56 = sshll.u32 [#allocation2], 4
    %s57 = int_to_ptr.vmem [resolvable:$true] %s56
    %59 = dma.hbm_to_vmem [thread:$0]  %s55, 1280, %s57, [#allocation6]
    %s60 = scalar_lea.sflag [#allocation6], 1
    // Predicated region
    $region22: #{decoder_forward.1} parent=1 // pred_check
      _
    $region23: #{decoder_forward.1} parent=1 // pred_check_branch
      %62 = sbr.rel target = $region25
    $region24: #{decoder_forward.1} parent=1 // pred_region
      %63 = sst [smem:[#allocation15]] [#allocation18]
      %64 = sst [smem:[#allocation16]] [#allocation17]
    $region25: #{decoder_forward.1} parent=1 // pred_fallthru
      _
    %66 = shalt.err (0)
    %s68 = sshll.u32 %s3, 4
    %s69 = int_to_ptr.hbm [resolvable:$true] %s68
    %s70 = sshll.u32 [#allocation3], 4
    %s71 = int_to_ptr.vmem [resolvable:$true] %s70
    %73 = dma.hbm_to_vmem [thread:$0]  %s69, 2048, %s71, %s60
    %s74 = scalar_lea.sflag [#allocation6], 2
    // Predicated region
    $region26: #{decoder_forward.1} parent=1 // pred_check
      _
    $region27: #{decoder_forward.1} parent=1 // pred_check_branch
      %76 = sbr.rel target = $region29
    $region28: #{decoder_forward.1} parent=1 // pred_region
      %77 = sst [smem:[#allocation15]] [#allocation20]
      %78 = sst [smem:[#allocation16]] [#allocation19]
    $region29: #{decoder_forward.1} parent=1 // pred_fallthru
      _
    %80 = shalt.err (0)
    %s82 = sshll.u32 %s4, 4
    %s83 = int_to_ptr.hbm [resolvable:$true] %s82
    %s84 = sshll.u32 [#allocation4], 4
    %s85 = int_to_ptr.vmem [resolvable:$true] %s84
    %87 = dma.hbm_to_vmem [thread:$0]  %s83, 8192, %s85, %s74
    %s88 = scalar_lea.sflag [#allocation6], 3
    // Predicated region
    $region30: #{decoder_forward.1} parent=1 // pred_check
      _
    $region31: #{decoder_forward.1} parent=1 // pred_check_branch
      %90 = sbr.rel target = $region33
    $region32: #{decoder_forward.1} parent=1 // pred_region
      %91 = sst [smem:[#allocation15]] [#allocation22]
      %92 = sst [smem:[#allocation16]] [#allocation21]
    $region33: #{decoder_forward.1} parent=1 // pred_fallthru
      _
    %94 = shalt.err (0)
    %s96 = sshll.u32 %s5, 4
    %s97 = int_to_ptr.hbm [resolvable:$true] %s96
    %s98 = sshll.u32 [#allocation5], 4
    %s99 = int_to_ptr.vmem [resolvable:$true] %s98
    %101 = dma.hbm_to_vmem [thread:$0]  %s97, 28672, %s99, %s88
    %v102 = vld [vmem:[#allocation7] sm:$0xff]
    %s103 = smul.u32 4, 20
    %s104 = smul.u32 %s103, 1
    %s105 = sshll.u32 %s104, 4
    %106 = dma.done [#allocation6], %s105
    %v107 = vld [vmem:[#allocation10] ss:$0 sm:$0xff]
    %v108 = vld [vmem:[#allocation10 + $0x1] ss:$0 sm:$0xff]
    %v109 = vld [vmem:[#allocation2] sm:$0xf]
    %v110 = vld [vmem:[#allocation2 + $0x4] sm:$0xf]
    %v111 = vld [vmem:[#allocation2 + $0x8] sm:$0xf]
    %v112 = vld [vmem:[#allocation2 + $0xc] sm:$0xf]
    %v113 = vpack.c.bf16 %v102, %v102
    %v118 = vunpack.c.l.b16 %v109
    %v119 = vunpack.c.l.b16 %v110
    %v120 = vunpack.c.l.b16 %v111
    %v121 = vunpack.c.l.b16 %v112
    %v122 = vpack.c.b16 %v119, %v118
    %v123 = vpack.c.b16 %v121, %v120
    %vm126 = vcmask 261120
    %v128 = vsel %vm126, %v113, 0
    %130 = vmatpush.bf16.msra.mxu0 0
    %131 = vmatpush.bf16.msra.mxu0 0
    %132 = vmatpush.bf16.msra.mxu0 0
    %133 = vmatpush.bf16.msra.mxu0 0
    %134 = vmatpush.bf16.msra.mxu0 0
    %135 = vmatpush.bf16.msra.mxu0 0
    %136 = vmatpush.bf16.msra.mxu0 %v123
    %137 = vmatpush.bf16.msra.mxu0 %v122
    %138 = vmatmul.bf16.gmra.mxu0 %v128
    %v139 = vpop.f32.mrf.mxu0
    %v140 = vadd.f32 0.0, %v139
    %v141 = vpop.f32.mrf.mxu0
    %142 = vdwg.mxu0
    %v143 = vrot.slane %v140, 4
    %v144 = vadd.f32 %v140, %v143
    %v145 = vrot.slane %v144, 2
    %v146 = vadd.f32 %v144, %v145
    %v147 = vrot.slane %v146, 1
    %v148 = vadd.f32 %v146, %v147
    %v149 = vmul.f32 %v148, 0.125
    %v150 = vsub.f32 %v140, %v149
    %v151 = vmul.f32 %v150, %v150
    %v152 = vrot.slane %v151, 4
    %v153 = vadd.f32 %v151, %v152
    %v154 = vrot.slane %v153, 2
    %v155 = vadd.f32 %v153, %v154
    %v156 = vrot.slane %v155, 1
    %v157 = vadd.f32 %v155, %v156
    %v158 = vmul.f32 %v157, 0.125
    %v159 = vadd.f32 %v158, 1e-05
    %v160 = vrsqrt.pop %v159
    %v161 = vmul.f32 %v160, %v159
    %v162 = vmul.f32 %v161, %v160
    %v163 = vmul.f32 0.5, %v162
    %v164 = vsub.f32 1.5, %v163
    %v165 = vmul.f32 %v160, %v164
    %vm166 = vweird.f32 %v159
    %vm167 = vweird.f32 %v160
    %vm168 = vmor %vm166, %vm167
    %v169 = vsel %vm168, %v160, %v165
    %v170 = vmul.f32 %v107, %v169
    %v171 = vmul.f32 %v150, %v170
    %v172 = vadd.f32 %v171, %v108
    %v173 = vmul.f32 %v172, 0.01
    %v174 = vmax.f32 %v172, %v173
    %v175 = vld [vmem:[#allocation10 + $0x2] ss:$0 sm:$0xff]
    %v176 = vld [vmem:[#allocation10 + $0x3] ss:$0 sm:$0xff]
    %v177 = vld [vmem:[#allocation2 + $0x10] sm:$0xf]
    %v178 = vld [vmem:[#allocation2 + $0x14] sm:$0xf]
    %v179 = vld [vmem:[#allocation2 + $0x18] sm:$0xf]
    %v180 = vld [vmem:[#allocation2 + $0x1c] sm:$0xf]
    %v181 = vld [vmem:[#allocation2 + $0x20] sm:$0xf]
    %v182 = vld [vmem:[#allocation2 + $0x24] sm:$0xf]
    %v183 = vld [vmem:[#allocation2 + $0x28] sm:$0xf]
    %v184 = vld [vmem:[#allocation2 + $0x2c] sm:$0xf]
    %v185 = vld [vmem:[#allocation2 + $0x30] sm:$0xf]
    %v186 = vld [vmem:[#allocation2 + $0x34] sm:$0xf]
    %v187 = vld [vmem:[#allocation2 + $0x38] sm:$0xf]
    %v188 = vld [vmem:[#allocation2 + $0x3c] sm:$0xf]
    %v189 = vld [vmem:[#allocation2 + $0x40] sm:$0xf]
    %v190 = vld [vmem:[#allocation2 + $0x44] sm:$0xf]
    %v191 = vld [vmem:[#allocation2 + $0x48] sm:$0xf]
    %v192 = vld [vmem:[#allocation2 + $0x4c] sm:$0xf]
    %v193 = vpack.c.bf16 %v174, %v174
    %v210 = vunpack.c.l.b16 %v177
    %v211 = vunpack.c.l.b16 %v178
    %v212 = vunpack.c.l.b16 %v179
    %v213 = vunpack.c.l.b16 %v180
    %v214 = vunpack.c.l.b16 %v181
    %v215 = vunpack.c.l.b16 %v182
    %v216 = vunpack.c.l.b16 %v183
    %v217 = vunpack.c.l.b16 %v184
    %v218 = vunpack.c.l.b16 %v185
    %v219 = vunpack.c.l.b16 %v186
    %v220 = vunpack.c.l.b16 %v187
    %v221 = vunpack.c.l.b16 %v188
    %v222 = vunpack.c.l.b16 %v189
    %v223 = vunpack.c.l.b16 %v190
    %v224 = vunpack.c.l.b16 %v191
    %v225 = vunpack.c.l.b16 %v192
    %v226 = vpack.c.b16 %v211, %v210
    %v227 = vpack.c.b16 %v213, %v212
    %v228 = vpack.c.b16 %v215, %v214
    %v229 = vpack.c.b16 %v217, %v216
    %v230 = vpack.c.b16 %v219, %v218
    %v231 = vpack.c.b16 %v221, %v220
    %v232 = vpack.c.b16 %v223, %v222
    %v233 = vpack.c.b16 %v225, %v224
    %242 = vmatpush.bf16.msra.mxu0 %v233
    %243 = vmatpush.bf16.msra.mxu0 %v232
    %244 = vmatpush.bf16.msra.mxu0 %v231
    %245 = vmatpush.bf16.msra.mxu0 %v230
    %246 = vmatpush.bf16.msra.mxu0 %v229
    %247 = vmatpush.bf16.msra.mxu0 %v228
    %248 = vmatpush.bf16.msra.mxu0 %v227
    %249 = vmatpush.bf16.msra.mxu0 %v226
    %250 = vmatmul.bf16.gmra.mxu0 %v193
    %v251 = vpop.f32.mrf.mxu0
    %v252 = vadd.f32 0.0, %v251
    %v253 = vpop.f32.mrf.mxu0
    %254 = vdwg.mxu0
    %v255 = vrot.slane %v252, 4
    %v256 = vadd.f32 %v252, %v255
    %v257 = vrot.slane %v256, 2
    %v258 = vadd.f32 %v256, %v257
    %v259 = vrot.slane %v258, 1
    %v260 = vadd.f32 %v258, %v259
    %v261 = vmul.f32 %v260, 0.125
    %v262 = vsub.f32 %v252, %v261
    %v263 = vmul.f32 %v262, %v262
    %v264 = vrot.slane %v263, 4
    %v265 = vadd.f32 %v263, %v264
    %v266 = vrot.slane %v265, 2
    %v267 = vadd.f32 %v265, %v266
    %v268 = vrot.slane %v267, 1
    %v269 = vadd.f32 %v267, %v268
    %v270 = vmul.f32 %v269, 0.125
    %v271 = vadd.f32 %v270, 1e-05
    %v272 = vrsqrt.pop %v271
    %v273 = vmul.f32 %v272, %v271
    %v274 = vmul.f32 %v273, %v272
    %v275 = vmul.f32 0.5, %v274
    %v276 = vsub.f32 1.5, %v275
    %v277 = vmul.f32 %v272, %v276
    %vm278 = vweird.f32 %v271
    %vm279 = vweird.f32 %v272
    %vm280 = vmor %vm278, %vm279
    %v281 = vsel %vm280, %v272, %v277
    %v282 = vmul.f32 %v175, %v281
    %v283 = vmul.f32 %v262, %v282
    %v284 = vadd.f32 %v283, %v176
    %v285 = vmul.f32 %v284, 0.01
    %v286 = vmax.f32 %v284, %v285
    %s287 = smul.u32 4, 16
    %s288 = smul.u32 %s287, 2
    %s289 = sshll.u32 %s288, 4
    %290 = dma.done %s60, %s289
    %s291 = scalar_lea.vmem [#allocation10], 4
    %v292 = vld [vmem:[%s291] ss:$8 sm:$0x3]
    %s293 = scalar_lea.vmem [#allocation10], 5
    %v294 = vld [vmem:[%s293] ss:$8 sm:$0x3]
    %v295 = vld [vmem:[#allocation3] sm:$0xff]
    %v296 = vld [vmem:[#allocation3 + $0x8] sm:$0xff]
    %v297 = vld [vmem:[#allocation3 + $0x10] sm:$0xff]
    %v298 = vld [vmem:[#allocation3 + $0x18] sm:$0xff]
    %v299 = vld [vmem:[#allocation3 + $0x20] sm:$0xff]
    %v300 = vld [vmem:[#allocation3 + $0x28] sm:$0xff]
    %v301 = vld [vmem:[#allocation3 + $0x30] sm:$0xff]
    %v302 = vld [vmem:[#allocation3 + $0x38] sm:$0xff]
    %v303 = vld [vmem:[#allocation3 + $0x40] sm:$0xff]
    %v304 = vld [vmem:[#allocation3 + $0x48] sm:$0xff]
    %v305 = vld [vmem:[#allocation3 + $0x50] sm:$0xff]
    %v306 = vld [vmem:[#allocation3 + $0x58] sm:$0xff]
    %v307 = vld [vmem:[#allocation3 + $0x60] sm:$0xff]
    %v308 = vld [vmem:[#allocation3 + $0x68] sm:$0xff]
    %v309 = vld [vmem:[#allocation3 + $0x70] sm:$0xff]
    %v310 = vld [vmem:[#allocation3 + $0x78] sm:$0xff]
    %v311 = vpack.c.bf16 %v286, %v286
    %v328 = vunpack.c.l.b16 %v295
    %v329 = vunpack.c.h.b16 %v295
    %v330 = vunpack.c.l.b16 %v296
    %v331 = vunpack.c.h.b16 %v296
    %v332 = vunpack.c.l.b16 %v297
    %v333 = vunpack.c.h.b16 %v297
    %v334 = vunpack.c.l.b16 %v298
    %v335 = vunpack.c.h.b16 %v298
    %v336 = vunpack.c.l.b16 %v299
    %v337 = vunpack.c.h.b16 %v299
    %v338 = vunpack.c.l.b16 %v300
    %v339 = vunpack.c.h.b16 %v300
    %v340 = vunpack.c.l.b16 %v301
    %v341 = vunpack.c.h.b16 %v301
    %v342 = vunpack.c.l.b16 %v302
    %v343 = vunpack.c.h.b16 %v302
    %v344 = vunpack.c.l.b16 %v303
    %v345 = vunpack.c.h.b16 %v303
    %v346 = vunpack.c.l.b16 %v304
    %v347 = vunpack.c.h.b16 %v304
    %v348 = vunpack.c.l.b16 %v305
    %v349 = vunpack.c.h.b16 %v305
    %v350 = vunpack.c.l.b16 %v306
    %v351 = vunpack.c.h.b16 %v306
    %v352 = vunpack.c.l.b16 %v307
    %v353 = vunpack.c.h.b16 %v307
    %v354 = vunpack.c.l.b16 %v308
    %v355 = vunpack.c.h.b16 %v308
    %v356 = vunpack.c.l.b16 %v309
    %v357 = vunpack.c.h.b16 %v309
    %v358 = vunpack.c.l.b16 %v310
    %v359 = vunpack.c.h.b16 %v310
    %v360 = vpack.c.b16 %v330, %v328
    %v361 = vpack.c.b16 %v331, %v329
    %v362 = vpack.c.b16 %v334, %v332
    %v363 = vpack.c.b16 %v335, %v333
    %v364 = vpack.c.b16 %v338, %v336
    %v365 = vpack.c.b16 %v339, %v337
    %v366 = vpack.c.b16 %v342, %v340
    %v367 = vpack.c.b16 %v343, %v341
    %v368 = vpack.c.b16 %v346, %v344
    %v369 = vpack.c.b16 %v347, %v345
    %v370 = vpack.c.b16 %v350, %v348
    %v371 = vpack.c.b16 %v351, %v349
    %v372 = vpack.c.b16 %v354, %v352
    %v373 = vpack.c.b16 %v355, %v353
    %v374 = vpack.c.b16 %v358, %v356
    %v375 = vpack.c.b16 %v359, %v357
    %392 = vmatpush.bf16.msra.mxu0 %v374
    %393 = vmatpush.bf16.msra.mxu0 %v372
    %394 = vmatpush.bf16.msra.mxu0 %v370
    %395 = vmatpush.bf16.msra.mxu0 %v368
    %396 = vmatpush.bf16.msra.mxu0 %v366
    %397 = vmatpush.bf16.msra.mxu0 %v364
    %398 = vmatpush.bf16.msra.mxu0 %v362
    %399 = vmatpush.bf16.msra.mxu0 %v360
    %400 = vmatmul.bf16.gmra.mxu0 %v311
    %v401 = vpop.f32.mrf.mxu0
    %v402 = vadd.f32 0.0, %v401
    %v403 = vpop.f32.mrf.mxu0
    %404 = vdwg.mxu0
    %405 = vmatpush.bf16.msra.mxu0 %v375
    %406 = vmatpush.bf16.msra.mxu0 %v373
    %407 = vmatpush.bf16.msra.mxu0 %v371
    %408 = vmatpush.bf16.msra.mxu0 %v369
    %409 = vmatpush.bf16.msra.mxu0 %v367
    %410 = vmatpush.bf16.msra.mxu0 %v365
    %411 = vmatpush.bf16.msra.mxu0 %v363
    %412 = vmatpush.bf16.msra.mxu0 %v361
    %413 = vmatmul.bf16.gmra.mxu0 %v311
    %v414 = vpop.f32.mrf.mxu0
    %v415 = vadd.f32 0.0, %v414
    %v416 = vpop.f32.mrf.mxu0
    %417 = vdwg.mxu0
    %v418 = vrot.slane %v402, 4
    %v419 = vadd.f32 %v402, %v418
    %v420 = vrot.slane %v419, 2
    %v421 = vadd.f32 %v419, %v420
    %v422 = vrot.slane %v421, 1
    %v423 = vadd.f32 %v421, %v422
    %v424 = vrot.slane %v415, 4
    %v425 = vadd.f32 %v415, %v424
    %v426 = vrot.slane %v425, 2
    %v427 = vadd.f32 %v425, %v426
    %v428 = vrot.slane %v427, 1
    %v429 = vadd.f32 %v427, %v428
    %v430 = vmul.f32 %v423, 0.125
    %v431 = vmul.f32 %v429, 0.125
    %v432 = vsub.f32 %v402, %v430
    %v433 = vsub.f32 %v415, %v431
    %v434 = vmul.f32 %v432, %v432
    %v435 = vmul.f32 %v433, %v433
    %v436 = vrot.slane %v434, 4
    %v437 = vadd.f32 %v434, %v436
    %v438 = vrot.slane %v437, 2
    %v439 = vadd.f32 %v437, %v438
    %v440 = vrot.slane %v439, 1
    %v441 = vadd.f32 %v439, %v440
    %v442 = vrot.slane %v435, 4
    %v443 = vadd.f32 %v435, %v442
    %v444 = vrot.slane %v443, 2
    %v445 = vadd.f32 %v443, %v444
    %v446 = vrot.slane %v445, 1
    %v447 = vadd.f32 %v445, %v446
    %v448 = vmul.f32 %v441, 0.125
    %v449 = vmul.f32 %v447, 0.125
    %v450 = vadd.f32 %v448, 1e-05
    %v451 = vadd.f32 %v449, 1e-05
    %v452 = vrsqrt.pop %v450
    %v453 = vmul.f32 %v452, %v450
    %v454 = vmul.f32 %v453, %v452
    %v455 = vmul.f32 0.5, %v454
    %v456 = vsub.f32 1.5, %v455
    %v457 = vmul.f32 %v452, %v456
    %vm458 = vweird.f32 %v450
    %vm459 = vweird.f32 %v452
    %vm460 = vmor %vm458, %vm459
    %v461 = vsel %vm460, %v452, %v457
    %v462 = vrsqrt.pop %v451
    %v463 = vmul.f32 %v462, %v451
    %v464 = vmul.f32 %v463, %v462
    %v465 = vmul.f32 0.5, %v464
    %v466 = vsub.f32 1.5, %v465
    %v467 = vmul.f32 %v462, %v466
    %vm468 = vweird.f32 %v451
    %vm469 = vweird.f32 %v462
    %vm470 = vmor %vm468, %vm469
    %v471 = vsel %vm470, %v462, %v467
    %v474 = vrot.slane %v471, 7
    %vm475 = vcmask 1040384
    %v476 = vsel %vm475, %v461, %v474
    %v478 = vmul.f32 %v292, %v476
    %v480 = vperm.slane %v478, 0
    %v481 = vperm.slane %v478, 1
    %v484 = vmul.f32 %v432, %v480
    %v485 = vmul.f32 %v433, %v481
    %v487 = vperm.slane %v294, 0
    %v488 = vperm.slane %v294, 1
    %v491 = vadd.f32 %v484, %v487
    %v492 = vadd.f32 %v485, %v488
    %v493 = vmul.f32 %v491, 0.01
    %v494 = vmul.f32 %v492, 0.01
    %v495 = vmax.f32 %v491, %v493
    %v496 = vmax.f32 %v492, %v494
    %s497 = smul.u32 4, 32
    %s498 = smul.u32 %s497, 4
    %s499 = sshll.u32 %s498, 4
    %500 = dma.done %s74, %s499
    %s501 = scalar_lea.vmem [#allocation10], 6
    %v502 = vld [vmem:[%s501] ss:$8 sm:$0xf]
    %s503 = scalar_lea.vmem [#allocation10], 7
    %v504 = vld [vmem:[%s503] ss:$8 sm:$0xf]
    %v505 = vld [vmem:[#allocation4] sm:$0xff]
    %v506 = vld [vmem:[#allocation4 + $0x8] sm:$0xff]
    %v507 = vld [vmem:[#allocation4 + $0x10] sm:$0xff]
    %v508 = vld [vmem:[#allocation4 + $0x18] sm:$0xff]
    %v509 = vld [vmem:[#allocation4 + $0x20] sm:$0xff]
    %v510 = vld [vmem:[#allocation4 + $0x28] sm:$0xff]
    %v511 = vld [vmem:[#allocation4 + $0x30] sm:$0xff]
    %v512 = vld [vmem:[#allocation4 + $0x38] sm:$0xff]
    %v513 = vld [vmem:[#allocation4 + $0x40] sm:$0xff]
    %v514 = vld [vmem:[#allocation4 + $0x48] sm:$0xff]
    %v515 = vld [vmem:[#allocation4 + $0x50] sm:$0xff]
    %v516 = vld [vmem:[#allocation4 + $0x58] sm:$0xff]
    %v517 = vld [vmem:[#allocation4 + $0x60] sm:$0xff]
    %v518 = vld [vmem:[#allocation4 + $0x68] sm:$0xff]
    %v519 = vld [vmem:[#allocation4 + $0x70] sm:$0xff]
    %v520 = vld [vmem:[#allocation4 + $0x78] sm:$0xff]
    %v521 = vld [vmem:[#allocation4 + $0x80] sm:$0xff]
    %v522 = vld [vmem:[#allocation4 + $0x88] sm:$0xff]
    %v523 = vld [vmem:[#allocation4 + $0x90] sm:$0xff]
    %v524 = vld [vmem:[#allocation4 + $0x98] sm:$0xff]
    %v525 = vld [vmem:[#allocation4 + $0xa0] sm:$0xff]
    %v526 = vld [vmem:[#allocation4 + $0xa8] sm:$0xff]
    %v527 = vld [vmem:[#allocation4 + $0xb0] sm:$0xff]
    %v528 = vld [vmem:[#allocation4 + $0xb8] sm:$0xff]
    %v529 = vld [vmem:[#allocation4 + $0xc0] sm:$0xff]
    %v530 = vld [vmem:[#allocation4 + $0xc8] sm:$0xff]
    %v531 = vld [vmem:[#allocation4 + $0xd0] sm:$0xff]
    %v532 = vld [vmem:[#allocation4 + $0xd8] sm:$0xff]
    %v533 = vld [vmem:[#allocation4 + $0xe0] sm:$0xff]
    %v534 = vld [vmem:[#allocation4 + $0xe8] sm:$0xff]
    %v535 = vld [vmem:[#allocation4 + $0xf0] sm:$0xff]
    %v536 = vld [vmem:[#allocation4 + $0xf8] sm:$0xff]
    %v537 = vld [vmem:[#allocation4 + $0x100] sm:$0xff]
    %v538 = vld [vmem:[#allocation4 + $0x108] sm:$0xff]
    %v539 = vld [vmem:[#allocation4 + $0x110] sm:$0xff]
    %v540 = vld [vmem:[#allocation4 + $0x118] sm:$0xff]
    %v541 = vld [vmem:[#allocation4 + $0x120] sm:$0xff]
    %v542 = vld [vmem:[#allocation4 + $0x128] sm:$0xff]
    %v543 = vld [vmem:[#allocation4 + $0x130] sm:$0xff]
    %v544 = vld [vmem:[#allocation4 + $0x138] sm:$0xff]
    %v545 = vld [vmem:[#allocation4 + $0x140] sm:$0xff]
    %v546 = vld [vmem:[#allocation4 + $0x148] sm:$0xff]
    %v547 = vld [vmem:[#allocation4 + $0x150] sm:$0xff]
    %v548 = vld [vmem:[#allocation4 + $0x158] sm:$0xff]
    %v549 = vld [vmem:[#allocation4 + $0x160] sm:$0xff]
    %v550 = vld [vmem:[#allocation4 + $0x168] sm:$0xff]
    %v551 = vld [vmem:[#allocation4 + $0x170] sm:$0xff]
    %v552 = vld [vmem:[#allocation4 + $0x178] sm:$0xff]
    %v553 = vld [vmem:[#allocation4 + $0x180] sm:$0xff]
    %v554 = vld [vmem:[#allocation4 + $0x188] sm:$0xff]
    %v555 = vld [vmem:[#allocation4 + $0x190] sm:$0xff]
    %v556 = vld [vmem:[#allocation4 + $0x198] sm:$0xff]
    %v557 = vld [vmem:[#allocation4 + $0x1a0] sm:$0xff]
    %v558 = vld [vmem:[#allocation4 + $0x1a8] sm:$0xff]
    %v559 = vld [vmem:[#allocation4 + $0x1b0] sm:$0xff]
    %v560 = vld [vmem:[#allocation4 + $0x1b8] sm:$0xff]
    %v561 = vld [vmem:[#allocation4 + $0x1c0] sm:$0xff]
    %v562 = vld [vmem:[#allocation4 + $0x1c8] sm:$0xff]
    %v563 = vld [vmem:[#allocation4 + $0x1d0] sm:$0xff]
    %v564 = vld [vmem:[#allocation4 + $0x1d8] sm:$0xff]
    %v565 = vld [vmem:[#allocation4 + $0x1e0] sm:$0xff]
    %v566 = vld [vmem:[#allocation4 + $0x1e8] sm:$0xff]
    %v567 = vld [vmem:[#allocation4 + $0x1f0] sm:$0xff]
    %v568 = vld [vmem:[#allocation4 + $0x1f8] sm:$0xff]
    %v569 = vpack.c.bf16 %v495, %v495
    %v570 = vpack.c.bf16 %v496, %v496
    %v635 = vunpack.c.l.b16 %v505
    %v636 = vunpack.c.h.b16 %v505
    %v637 = vunpack.c.l.b16 %v506
    %v638 = vunpack.c.h.b16 %v506
    %v639 = vunpack.c.l.b16 %v507
    %v640 = vunpack.c.h.b16 %v507
    %v641 = vunpack.c.l.b16 %v508
    %v642 = vunpack.c.h.b16 %v508
    %v643 = vunpack.c.l.b16 %v509
    %v644 = vunpack.c.h.b16 %v509
    %v645 = vunpack.c.l.b16 %v510
    %v646 = vunpack.c.h.b16 %v510
    %v647 = vunpack.c.l.b16 %v511
    %v648 = vunpack.c.h.b16 %v511
    %v649 = vunpack.c.l.b16 %v512
    %v650 = vunpack.c.h.b16 %v512
    %v651 = vunpack.c.l.b16 %v513
    %v652 = vunpack.c.h.b16 %v513
    %v653 = vunpack.c.l.b16 %v514
    %v654 = vunpack.c.h.b16 %v514
    %v655 = vunpack.c.l.b16 %v515
    %v656 = vunpack.c.h.b16 %v515
    %v657 = vunpack.c.l.b16 %v516
    %v658 = vunpack.c.h.b16 %v516
    %v659 = vunpack.c.l.b16 %v517
    %v660 = vunpack.c.h.b16 %v517
    %v661 = vunpack.c.l.b16 %v518
    %v662 = vunpack.c.h.b16 %v518
    %v663 = vunpack.c.l.b16 %v519
    %v664 = vunpack.c.h.b16 %v519
    %v665 = vunpack.c.l.b16 %v520
    %v666 = vunpack.c.h.b16 %v520
    %v667 = vunpack.c.l.b16 %v521
    %v668 = vunpack.c.h.b16 %v521
    %v669 = vunpack.c.l.b16 %v522
    %v670 = vunpack.c.h.b16 %v522
    %v671 = vunpack.c.l.b16 %v523
    %v672 = vunpack.c.h.b16 %v523
    %v673 = vunpack.c.l.b16 %v524
    %v674 = vunpack.c.h.b16 %v524
    %v675 = vunpack.c.l.b16 %v525
    %v676 = vunpack.c.h.b16 %v525
    %v677 = vunpack.c.l.b16 %v526
    %v678 = vunpack.c.h.b16 %v526
    %v679 = vunpack.c.l.b16 %v527
    %v680 = vunpack.c.h.b16 %v527
    %v681 = vunpack.c.l.b16 %v528
    %v682 = vunpack.c.h.b16 %v528
    %v683 = vunpack.c.l.b16 %v529
    %v684 = vunpack.c.h.b16 %v529
    %v685 = vunpack.c.l.b16 %v530
    %v686 = vunpack.c.h.b16 %v530
    %v687 = vunpack.c.l.b16 %v531
    %v688 = vunpack.c.h.b16 %v531
    %v689 = vunpack.c.l.b16 %v532
    %v690 = vunpack.c.h.b16 %v532
    %v691 = vunpack.c.l.b16 %v533
    %v692 = vunpack.c.h.b16 %v533
    %v693 = vunpack.c.l.b16 %v534
    %v694 = vunpack.c.h.b16 %v534
    %v695 = vunpack.c.l.b16 %v535
    %v696 = vunpack.c.h.b16 %v535
    %v697 = vunpack.c.l.b16 %v536
    %v698 = vunpack.c.h.b16 %v536
    %v699 = vunpack.c.l.b16 %v537
    %v700 = vunpack.c.h.b16 %v537
    %v701 = vunpack.c.l.b16 %v538
    %v702 = vunpack.c.h.b16 %v538
    %v703 = vunpack.c.l.b16 %v539
    %v704 = vunpack.c.h.b16 %v539
    %v705 = vunpack.c.l.b16 %v540
    %v706 = vunpack.c.h.b16 %v540
    %v707 = vunpack.c.l.b16 %v541
    %v708 = vunpack.c.h.b16 %v541
    %v709 = vunpack.c.l.b16 %v542
    %v710 = vunpack.c.h.b16 %v542
    %v711 = vunpack.c.l.b16 %v543
    %v712 = vunpack.c.h.b16 %v543
    %v713 = vunpack.c.l.b16 %v544
    %v714 = vunpack.c.h.b16 %v544
    %v715 = vunpack.c.l.b16 %v545
    %v716 = vunpack.c.h.b16 %v545
    %v717 = vunpack.c.l.b16 %v546
    %v718 = vunpack.c.h.b16 %v546
    %v719 = vunpack.c.l.b16 %v547
    %v720 = vunpack.c.h.b16 %v547
    %v721 = vunpack.c.l.b16 %v548
    %v722 = vunpack.c.h.b16 %v548
    %v723 = vunpack.c.l.b16 %v549
    %v724 = vunpack.c.h.b16 %v549
    %v725 = vunpack.c.l.b16 %v550
    %v726 = vunpack.c.h.b16 %v550
    %v727 = vunpack.c.l.b16 %v551
    %v728 = vunpack.c.h.b16 %v551
    %v729 = vunpack.c.l.b16 %v552
    %v730 = vunpack.c.h.b16 %v552
    %v731 = vunpack.c.l.b16 %v553
    %v732 = vunpack.c.h.b16 %v553
    %v733 = vunpack.c.l.b16 %v554
    %v734 = vunpack.c.h.b16 %v554
    %v735 = vunpack.c.l.b16 %v555
    %v736 = vunpack.c.h.b16 %v555
    %v737 = vunpack.c.l.b16 %v556
    %v738 = vunpack.c.h.b16 %v556
    %v739 = vunpack.c.l.b16 %v557
    %v740 = vunpack.c.h.b16 %v557
    %v741 = vunpack.c.l.b16 %v558
    %v742 = vunpack.c.h.b16 %v558
    %v743 = vunpack.c.l.b16 %v559
    %v744 = vunpack.c.h.b16 %v559
    %v745 = vunpack.c.l.b16 %v560
    %v746 = vunpack.c.h.b16 %v560
    %v747 = vunpack.c.l.b16 %v561
    %v748 = vunpack.c.h.b16 %v561
    %v749 = vunpack.c.l.b16 %v562
    %v750 = vunpack.c.h.b16 %v562
    %v751 = vunpack.c.l.b16 %v563
    %v752 = vunpack.c.h.b16 %v563
    %v753 = vunpack.c.l.b16 %v564
    %v754 = vunpack.c.h.b16 %v564
    %v755 = vunpack.c.l.b16 %v565
    %v756 = vunpack.c.h.b16 %v565
    %v757 = vunpack.c.l.b16 %v566
    %v758 = vunpack.c.h.b16 %v566
    %v759 = vunpack.c.l.b16 %v567
    %v760 = vunpack.c.h.b16 %v567
    %v761 = vunpack.c.l.b16 %v568
    %v762 = vunpack.c.h.b16 %v568
    %v763 = vpack.c.b16 %v639, %v635
    %v764 = vpack.c.b16 %v640, %v636
    %v765 = vpack.c.b16 %v641, %v637
    %v766 = vpack.c.b16 %v642, %v638
    %v767 = vpack.c.b16 %v647, %v643
    %v768 = vpack.c.b16 %v648, %v644
    %v769 = vpack.c.b16 %v649, %v645
    %v770 = vpack.c.b16 %v650, %v646
    %v771 = vpack.c.b16 %v655, %v651
    %v772 = vpack.c.b16 %v656, %v652
    %v773 = vpack.c.b16 %v657, %v653
    %v774 = vpack.c.b16 %v658, %v654
    %v775 = vpack.c.b16 %v663, %v659
    %v776 = vpack.c.b16 %v664, %v660
    %v777 = vpack.c.b16 %v665, %v661
    %v778 = vpack.c.b16 %v666, %v662
    %v779 = vpack.c.b16 %v671, %v667
    %v780 = vpack.c.b16 %v672, %v668
    %v781 = vpack.c.b16 %v673, %v669
    %v782 = vpack.c.b16 %v674, %v670
    %v783 = vpack.c.b16 %v679, %v675
    %v784 = vpack.c.b16 %v680, %v676
    %v785 = vpack.c.b16 %v681, %v677
    %v786 = vpack.c.b16 %v682, %v678
    %v787 = vpack.c.b16 %v687, %v683
    %v788 = vpack.c.b16 %v688, %v684
    %v789 = vpack.c.b16 %v689, %v685
    %v790 = vpack.c.b16 %v690, %v686
    %v791 = vpack.c.b16 %v695, %v691
    %v792 = vpack.c.b16 %v696, %v692
    %v793 = vpack.c.b16 %v697, %v693
    %v794 = vpack.c.b16 %v698, %v694
    %v795 = vpack.c.b16 %v703, %v699
    %v796 = vpack.c.b16 %v704, %v700
    %v797 = vpack.c.b16 %v705, %v701
    %v798 = vpack.c.b16 %v706, %v702
    %v799 = vpack.c.b16 %v711, %v707
    %v800 = vpack.c.b16 %v712, %v708
    %v801 = vpack.c.b16 %v713, %v709
    %v802 = vpack.c.b16 %v714, %v710
    %v803 = vpack.c.b16 %v719, %v715
    %v804 = vpack.c.b16 %v720, %v716
    %v805 = vpack.c.b16 %v721, %v717
    %v806 = vpack.c.b16 %v722, %v718
    %v807 = vpack.c.b16 %v727, %v723
    %v808 = vpack.c.b16 %v728, %v724
    %v809 = vpack.c.b16 %v729, %v725
    %v810 = vpack.c.b16 %v730, %v726
    %v811 = vpack.c.b16 %v735, %v731
    %v812 = vpack.c.b16 %v736, %v732
    %v813 = vpack.c.b16 %v737, %v733
    %v814 = vpack.c.b16 %v738, %v734
    %v815 = vpack.c.b16 %v743, %v739
    %v816 = vpack.c.b16 %v744, %v740
    %v817 = vpack.c.b16 %v745, %v741
    %v818 = vpack.c.b16 %v746, %v742
    %v819 = vpack.c.b16 %v751, %v747
    %v820 = vpack.c.b16 %v752, %v748
    %v821 = vpack.c.b16 %v753, %v749
    %v822 = vpack.c.b16 %v754, %v750
    %v823 = vpack.c.b16 %v759, %v755
    %v824 = vpack.c.b16 %v760, %v756
    %v825 = vpack.c.b16 %v761, %v757
    %v826 = vpack.c.b16 %v762, %v758
    %891 = vmatpush.bf16.msra.mxu0 %v791
    %892 = vmatpush.bf16.msra.mxu0 %v787
    %893 = vmatpush.bf16.msra.mxu0 %v783
    %894 = vmatpush.bf16.msra.mxu0 %v779
    %895 = vmatpush.bf16.msra.mxu0 %v775
    %896 = vmatpush.bf16.msra.mxu0 %v771
    %897 = vmatpush.bf16.msra.mxu0 %v767
    %898 = vmatpush.bf16.msra.mxu0 %v763
    %899 = vmatmul.bf16.gmra.mxu0 %v569
    %v900 = vpop.f32.mrf.mxu0
    %v901 = vadd.f32 0.0, %v900
    %v902 = vpop.f32.mrf.mxu0
    %903 = vdwg.mxu0
    %904 = vmatpush.bf16.msra.mxu0 %v823
    %905 = vmatpush.bf16.msra.mxu0 %v819
    %906 = vmatpush.bf16.msra.mxu0 %v815
    %907 = vmatpush.bf16.msra.mxu0 %v811
    %908 = vmatpush.bf16.msra.mxu0 %v807
    %909 = vmatpush.bf16.msra.mxu0 %v803
    %910 = vmatpush.bf16.msra.mxu0 %v799
    %911 = vmatpush.bf16.msra.mxu0 %v795
    %912 = vmatmul.bf16.gmra.mxu0 %v570
    %v913 = vpop.f32.mrf.mxu0
    %v914 = vadd.f32 %v901, %v913
    %v915 = vpop.f32.mrf.mxu0
    %916 = vdwg.mxu0
    %917 = vmatpush.bf16.msra.mxu0 %v792
    %918 = vmatpush.bf16.msra.mxu0 %v788
    %919 = vmatpush.bf16.msra.mxu0 %v784
    %920 = vmatpush.bf16.msra.mxu0 %v780
    %921 = vmatpush.bf16.msra.mxu0 %v776
    %922 = vmatpush.bf16.msra.mxu0 %v772
    %923 = vmatpush.bf16.msra.mxu0 %v768
    %924 = vmatpush.bf16.msra.mxu0 %v764
    %925 = vmatmul.bf16.gmra.mxu0 %v569
    %v926 = vpop.f32.mrf.mxu0
    %v927 = vadd.f32 0.0, %v926
    %v928 = vpop.f32.mrf.mxu0
    %929 = vdwg.mxu0
    %930 = vmatpush.bf16.msra.mxu0 %v824
    %931 = vmatpush.bf16.msra.mxu0 %v820
    %932 = vmatpush.bf16.msra.mxu0 %v816
    %933 = vmatpush.bf16.msra.mxu0 %v812
    %934 = vmatpush.bf16.msra.mxu0 %v808
    %935 = vmatpush.bf16.msra.mxu0 %v804
    %936 = vmatpush.bf16.msra.mxu0 %v800
    %937 = vmatpush.bf16.msra.mxu0 %v796
    %938 = vmatmul.bf16.gmra.mxu0 %v570
    %v939 = vpop.f32.mrf.mxu0
    %v940 = vadd.f32 %v927, %v939
    %v941 = vpop.f32.mrf.mxu0
    %942 = vdwg.mxu0
    %943 = vmatpush.bf16.msra.mxu0 %v793
    %944 = vmatpush.bf16.msra.mxu0 %v789
    %945 = vmatpush.bf16.msra.mxu0 %v785
    %946 = vmatpush.bf16.msra.mxu0 %v781
    %947 = vmatpush.bf16.msra.mxu0 %v777
    %948 = vmatpush.bf16.msra.mxu0 %v773
    %949 = vmatpush.bf16.msra.mxu0 %v769
    %950 = vmatpush.bf16.msra.mxu0 %v765
    %951 = vmatmul.bf16.gmra.mxu0 %v569
    %v952 = vpop.f32.mrf.mxu0
    %v953 = vadd.f32 0.0, %v952
    %v954 = vpop.f32.mrf.mxu0
    %955 = vdwg.mxu0
    %956 = vmatpush.bf16.msra.mxu0 %v825
    %957 = vmatpush.bf16.msra.mxu0 %v821
    %958 = vmatpush.bf16.msra.mxu0 %v817
    %959 = vmatpush.bf16.msra.mxu0 %v813
    %960 = vmatpush.bf16.msra.mxu0 %v809
    %961 = vmatpush.bf16.msra.mxu0 %v805
    %962 = vmatpush.bf16.msra.mxu0 %v801
    %963 = vmatpush.bf16.msra.mxu0 %v797
    %964 = vmatmul.bf16.gmra.mxu0 %v570
    %v965 = vpop.f32.mrf.mxu0
    %v966 = vadd.f32 %v953, %v965
    %v967 = vpop.f32.mrf.mxu0
    %968 = vdwg.mxu0
    %969 = vmatpush.bf16.msra.mxu0 %v794
    %970 = vmatpush.bf16.msra.mxu0 %v790
    %971 = vmatpush.bf16.msra.mxu0 %v786
    %972 = vmatpush.bf16.msra.mxu0 %v782
    %973 = vmatpush.bf16.msra.mxu0 %v778
    %974 = vmatpush.bf16.msra.mxu0 %v774
    %975 = vmatpush.bf16.msra.mxu0 %v770
    %976 = vmatpush.bf16.msra.mxu0 %v766
    %977 = vmatmul.bf16.gmra.mxu0 %v569
    %v978 = vpop.f32.mrf.mxu0
    %v979 = vadd.f32 0.0, %v978
    %v980 = vpop.f32.mrf.mxu0
    %981 = vdwg.mxu0
    %982 = vmatpush.bf16.msra.mxu0 %v826
    %983 = vmatpush.bf16.msra.mxu0 %v822
    %984 = vmatpush.bf16.msra.mxu0 %v818
    %985 = vmatpush.bf16.msra.mxu0 %v814
    %986 = vmatpush.bf16.msra.mxu0 %v810
    %987 = vmatpush.bf16.msra.mxu0 %v806
    %988 = vmatpush.bf16.msra.mxu0 %v802
    %989 = vmatpush.bf16.msra.mxu0 %v798
    %990 = vmatmul.bf16.gmra.mxu0 %v570
    %v991 = vpop.f32.mrf.mxu0
    %v992 = vadd.f32 %v979, %v991
    %v993 = vpop.f32.mrf.mxu0
    %994 = vdwg.mxu0
    %v995 = vrot.slane %v914, 4
    %v996 = vadd.f32 %v914, %v995
    %v997 = vrot.slane %v996, 2
    %v998 = vadd.f32 %v996, %v997
    %v999 = vrot.slane %v998, 1
    %v1000 = vadd.f32 %v998, %v999
    %v1001 = vrot.slane %v940, 4
    %v1002 = vadd.f32 %v940, %v1001
    %v1003 = vrot.slane %v1002, 2
    %v1004 = vadd.f32 %v1002, %v1003
    %v1005 = vrot.slane %v1004, 1
    %v1006 = vadd.f32 %v1004, %v1005
    %v1007 = vrot.slane %v966, 4
    %v1008 = vadd.f32 %v966, %v1007
    %v1009 = vrot.slane %v1008, 2
    %v1010 = vadd.f32 %v1008, %v1009
    %v1011 = vrot.slane %v1010, 1
    %v1012 = vadd.f32 %v1010, %v1011
    %v1013 = vrot.slane %v992, 4
    %v1014 = vadd.f32 %v992, %v1013
    %v1015 = vrot.slane %v1014, 2
    %v1016 = vadd.f32 %v1014, %v1015
    %v1017 = vrot.slane %v1016, 1
    %v1018 = vadd.f32 %v1016, %v1017
    %v1019 = vmul.f32 %v1000, 0.125
    %v1020 = vmul.f32 %v1006, 0.125
    %v1021 = vmul.f32 %v1012, 0.125
    %v1022 = vmul.f32 %v1018, 0.125
    %v1023 = vsub.f32 %v914, %v1019
    %v1024 = vsub.f32 %v940, %v1020
    %v1025 = vsub.f32 %v966, %v1021
    %v1026 = vsub.f32 %v992, %v1022
    %v1027 = vmul.f32 %v1023, %v1023
    %v1028 = vmul.f32 %v1024, %v1024
    %v1029 = vmul.f32 %v1025, %v1025
    %v1030 = vmul.f32 %v1026, %v1026
    %v1031 = vrot.slane %v1027, 4
    %v1032 = vadd.f32 %v1027, %v1031
    %v1033 = vrot.slane %v1032, 2
    %v1034 = vadd.f32 %v1032, %v1033
    %v1035 = vrot.slane %v1034, 1
    %v1036 = vadd.f32 %v1034, %v1035
    %v1037 = vrot.slane %v1028, 4
    %v1038 = vadd.f32 %v1028, %v1037
    %v1039 = vrot.slane %v1038, 2
    %v1040 = vadd.f32 %v1038, %v1039
    %v1041 = vrot.slane %v1040, 1
    %v1042 = vadd.f32 %v1040, %v1041
    %v1043 = vrot.slane %v1029, 4
    %v1044 = vadd.f32 %v1029, %v1043
    %v1045 = vrot.slane %v1044, 2
    %v1046 = vadd.f32 %v1044, %v1045
    %v1047 = vrot.slane %v1046, 1
    %v1048 = vadd.f32 %v1046, %v1047
    %v1049 = vrot.slane %v1030, 4
    %v1050 = vadd.f32 %v1030, %v1049
    %v1051 = vrot.slane %v1050, 2
    %v1052 = vadd.f32 %v1050, %v1051
    %v1053 = vrot.slane %v1052, 1
    %v1054 = vadd.f32 %v1052, %v1053
    %v1055 = vmul.f32 %v1036, 0.125
    %v1056 = vmul.f32 %v1042, 0.125
    %v1057 = vmul.f32 %v1048, 0.125
    %v1058 = vmul.f32 %v1054, 0.125
    %v1059 = vadd.f32 %v1055, 1e-05
    %v1060 = vadd.f32 %v1056, 1e-05
    %v1061 = vadd.f32 %v1057, 1e-05
    %v1062 = vadd.f32 %v1058, 1e-05
    %v1063 = vrsqrt.pop %v1059
    %v1064 = vmul.f32 %v1063, %v1059
    %v1065 = vmul.f32 %v1064, %v1063
    %v1066 = vmul.f32 0.5, %v1065
    %v1067 = vsub.f32 1.5, %v1066
    %v1068 = vmul.f32 %v1063, %v1067
    %vm1069 = vweird.f32 %v1059
    %vm1070 = vweird.f32 %v1063
    %vm1071 = vmor %vm1069, %vm1070
    %v1072 = vsel %vm1071, %v1063, %v1068
    %v1073 = vrsqrt.pop %v1060
    %v1074 = vmul.f32 %v1073, %v1060
    %v1075 = vmul.f32 %v1074, %v1073
    %v1076 = vmul.f32 0.5, %v1075
    %v1077 = vsub.f32 1.5, %v1076
    %v1078 = vmul.f32 %v1073, %v1077
    %vm1079 = vweird.f32 %v1060
    %vm1080 = vweird.f32 %v1073
    %vm1081 = vmor %vm1079, %vm1080
    %v1082 = vsel %vm1081, %v1073, %v1078
    %v1083 = vrsqrt.pop %v1061
    %v1084 = vmul.f32 %v1083, %v1061
    %v1085 = vmul.f32 %v1084, %v1083
    %v1086 = vmul.f32 0.5, %v1085
    %v1087 = vsub.f32 1.5, %v1086
    %v1088 = vmul.f32 %v1083, %v1087
    %vm1089 = vweird.f32 %v1061
    %vm1090 = vweird.f32 %v1083
    %vm1091 = vmor %vm1089, %vm1090
    %v1092 = vsel %vm1091, %v1083, %v1088
    %v1093 = vrsqrt.pop %v1062
    %v1094 = vmul.f32 %v1093, %v1062
    %v1095 = vmul.f32 %v1094, %v1093
    %v1096 = vmul.f32 0.5, %v1095
    %v1097 = vsub.f32 1.5, %v1096
    %v1098 = vmul.f32 %v1093, %v1097
    %vm1099 = vweird.f32 %v1062
    %vm1100 = vweird.f32 %v1093
    %vm1101 = vmor %vm1099, %vm1100
    %v1102 = vsel %vm1101, %v1093, %v1098
    %v1107 = vrot.slane %v1082, 7
    %v1108 = vrot.slane %v1092, 6
    %v1109 = vrot.slane %v1102, 5
    %v1110 = vsel %vm475, %v1072, %v1107
    %vm1111 = vcmask 1042434
    %v1112 = vsel %vm1111, %v1108, %v1109
    %vm1113 = vcmask 1041408
    %v1114 = vsel %vm1113, %v1110, %v1112
    %v1116 = vmul.f32 %v502, %v1114
    %v1118 = vperm.slane %v1116, 0
    %v1119 = vperm.slane %v1116, 1
    %v1120 = vperm.slane %v1116, 2
    %v1121 = vperm.slane %v1116, 3
    %v1126 = vmul.f32 %v1023, %v1118
    %v1127 = vmul.f32 %v1024, %v1119
    %v1128 = vmul.f32 %v1025, %v1120
    %v1129 = vmul.f32 %v1026, %v1121
    %v1131 = vperm.slane %v504, 0
    %v1132 = vperm.slane %v504, 1
    %v1133 = vperm.slane %v504, 2
    %v1134 = vperm.slane %v504, 3
    %v1139 = vadd.f32 %v1126, %v1131
    %v1140 = vadd.f32 %v1127, %v1132
    %v1141 = vadd.f32 %v1128, %v1133
    %v1142 = vadd.f32 %v1129, %v1134
    %v1143 = vmul.f32 %v1139, 0.01
    %v1144 = vmul.f32 %v1140, 0.01
    %v1145 = vmul.f32 %v1141, 0.01
    %v1146 = vmul.f32 %v1142, 0.01
    %v1147 = vmax.f32 %v1139, %v1143
    %v1148 = vmax.f32 %v1140, %v1144
    %v1149 = vmax.f32 %v1141, %v1145
    %v1150 = vmax.f32 %v1142, %v1146
    %s1151 = smul.u32 4, 64
    %s1152 = smul.u32 %s1151, 7
    %s1153 = sshll.u32 %s1152, 4
    %1154 = dma.done %s88, %s1153
    %s1155 = scalar_lea.vmem [#allocation10], 56
    %v1156 = vld [vmem:[%s1155] ss:$8 sm:$0xf]
    %v1157 = vld [vmem:[%s1155] ss:$8 sm:$0xf0]
    %v1158 = vor.u32 %v1156, %v1157
    %s1159 = scalar_lea.vmem [#allocation10], 57
    %v1160 = vld [vmem:[%s1159] ss:$8 sm:$0xf]
    %v1161 = vld [vmem:[%s1159] ss:$8 sm:$0xf0]
    %v1162 = vor.u32 %v1160, %v1161
    %v1163 = vld [vmem:[#allocation5] sm:$0xff]
    %v1164 = vld [vmem:[#allocation5 + $0x8] sm:$0xff]
    %v1165 = vld [vmem:[#allocation5 + $0x10] sm:$0xff]
    %v1166 = vld [vmem:[#allocation5 + $0x18] sm:$0xf]
    %v1167 = vld [vmem:[#allocation5 + $0x1c] sm:$0xff]
    %v1168 = vld [vmem:[#allocation5 + $0x24] sm:$0xff]
    %v1169 = vld [vmem:[#allocation5 + $0x2c] sm:$0xff]
    %v1170 = vld [vmem:[#allocation5 + $0x34] sm:$0xf]
    %v1171 = vld [vmem:[#allocation5 + $0x38] sm:$0xff]
    %v1172 = vld [vmem:[#allocation5 + $0x40] sm:$0xff]
    %v1173 = vld [vmem:[#allocation5 + $0x48] sm:$0xff]
    %v1174 = vld [vmem:[#allocation5 + $0x50] sm:$0xf]
    %v1175 = vld [vmem:[#allocation5 + $0x54] sm:$0xff]
    %v1176 = vld [vmem:[#allocation5 + $0x5c] sm:$0xff]
    %v1177 = vld [vmem:[#allocation5 + $0x64] sm:$0xff]
    %v1178 = vld [vmem:[#allocation5 + $0x6c] sm:$0xf]
    %v1179 = vld [vmem:[#allocation5 + $0x70] sm:$0xff]
    %v1180 = vld [vmem:[#allocation5 + $0x78] sm:$0xff]
    %v1181 = vld [vmem:[#allocation5 + $0x80] sm:$0xff]
    %v1182 = vld [vmem:[#allocation5 + $0x88] sm:$0xf]
    %v1183 = vld [vmem:[#allocation5 + $0x8c] sm:$0xff]
    %v1184 = vld [vmem:[#allocation5 + $0x94] sm:$0xff]
    %v1185 = vld [vmem:[#allocation5 + $0x9c] sm:$0xff]
    %v1186 = vld [vmem:[#allocation5 + $0xa4] sm:$0xf]
    %v1187 = vld [vmem:[#allocation5 + $0xa8] sm:$0xff]
    %v1188 = vld [vmem:[#allocation5 + $0xb0] sm:$0xff]
    %v1189 = vld [vmem:[#allocation5 + $0xb8] sm:$0xff]
    %v1190 = vld [vmem:[#allocation5 + $0xc0] sm:$0xf]
    %v1191 = vld [vmem:[#allocation5 + $0xc4] sm:$0xff]
    %v1192 = vld [vmem:[#allocation5 + $0xcc] sm:$0xff]
    %v1193 = vld [vmem:[#allocation5 + $0xd4] sm:$0xff]
    %v1194 = vld [vmem:[#allocation5 + $0xdc] sm:$0xf]
    %v1195 = vld [vmem:[#allocation5 + $0xe0] sm:$0xff]
    %v1196 = vld [vmem:[#allocation5 + $0xe8] sm:$0xff]
    %v1197 = vld [vmem:[#allocation5 + $0xf0] sm:$0xff]
    %v1198 = vld [vmem:[#allocation5 + $0xf8] sm:$0xf]
    %v1199 = vld [vmem:[#allocation5 + $0xfc] sm:$0xff]
    %v1200 = vld [vmem:[#allocation5 + $0x104] sm:$0xff]
    %v1201 = vld [vmem:[#allocation5 + $0x10c] sm:$0xff]
    %v1202 = vld [vmem:[#allocation5 + $0x114] sm:$0xf]
    %v1203 = vld [vmem:[#allocation5 + $0x118] sm:$0xff]
    %v1204 = vld [vmem:[#allocation5 + $0x120] sm:$0xff]
    %v1205 = vld [vmem:[#allocation5 + $0x128] sm:$0xff]
    %v1206 = vld [vmem:[#allocation5 + $0x130] sm:$0xf]
    %v1207 = vld [vmem:[#allocation5 + $0x134] sm:$0xff]
    %v1208 = vld [vmem:[#allocation5 + $0x13c] sm:$0xff]
    %v1209 = vld [vmem:[#allocation5 + $0x144] sm:$0xff]
    %v1210 = vld [vmem:[#allocation5 + $0x14c] sm:$0xf]
    %v1211 = vld [vmem:[#allocation5 + $0x150] sm:$0xff]
    %v1212 = vld [vmem:[#allocation5 + $0x158] sm:$0xff]
    %v1213 = vld [vmem:[#allocation5 + $0x160] sm:$0xff]
    %v1214 = vld [vmem:[#allocation5 + $0x168] sm:$0xf]
    %v1215 = vld [vmem:[#allocation5 + $0x16c] sm:$0xff]
    %v1216 = vld [vmem:[#allocation5 + $0x174] sm:$0xff]
    %v1217 = vld [vmem:[#allocation5 + $0x17c] sm:$0xff]
    %v1218 = vld [vmem:[#allocation5 + $0x184] sm:$0xf]
    %v1219 = vld [vmem:[#allocation5 + $0x188] sm:$0xff]
    %v1220 = vld [vmem:[#allocation5 + $0x190] sm:$0xff]
    %v1221 = vld [vmem:[#allocation5 + $0x198] sm:$0xff]
    %v1222 = vld [vmem:[#allocation5 + $0x1a0] sm:$0xf]
    %v1223 = vld [vmem:[#allocation5 + $0x1a4] sm:$0xff]
    %v1224 = vld [vmem:[#allocation5 + $0x1ac] sm:$0xff]
    %v1225 = vld [vmem:[#allocation5 + $0x1b4] sm:$0xff]
    %v1226 = vld [vmem:[#allocation5 + $0x1bc] sm:$0xf]
    %v1227 = vld [vmem:[#allocation5 + $0x1c0] sm:$0xff]
    %v1228 = vld [vmem:[#allocation5 + $0x1c8] sm:$0xff]
    %v1229 = vld [vmem:[#allocation5 + $0x1d0] sm:$0xff]
    %v1230 = vld [vmem:[#allocation5 + $0x1d8] sm:$0xf]
    %v1231 = vld [vmem:[#allocation5 + $0x1dc] sm:$0xff]
    %v1232 = vld [vmem:[#allocation5 + $0x1e4] sm:$0xff]
    %v1233 = vld [vmem:[#allocation5 + $0x1ec] sm:$0xff]
    %v1234 = vld [vmem:[#allocation5 + $0x1f4] sm:$0xf]
    %v1235 = vld [vmem:[#allocation5 + $0x1f8] sm:$0xff]
    %v1236 = vld [vmem:[#allocation5 + $0x200] sm:$0xff]
    %v1237 = vld [vmem:[#allocation5 + $0x208] sm:$0xff]
    %v1238 = vld [vmem:[#allocation5 + $0x210] sm:$0xf]
    %v1239 = vld [vmem:[#allocation5 + $0x214] sm:$0xff]
    %v1240 = vld [vmem:[#allocation5 + $0x21c] sm:$0xff]
    %v1241 = vld [vmem:[#allocation5 + $0x224] sm:$0xff]
    %v1242 = vld [vmem:[#allocation5 + $0x22c] sm:$0xf]
    %v1243 = vld [vmem:[#allocation5 + $0x230] sm:$0xff]
    %v1244 = vld [vmem:[#allocation5 + $0x238] sm:$0xff]
    %v1245 = vld [vmem:[#allocation5 + $0x240] sm:$0xff]
    %v1246 = vld [vmem:[#allocation5 + $0x248] sm:$0xf]
    %v1247 = vld [vmem:[#allocation5 + $0x24c] sm:$0xff]
    %v1248 = vld [vmem:[#allocation5 + $0x254] sm:$0xff]
    %v1249 = vld [vmem:[#allocation5 + $0x25c] sm:$0xff]
    %v1250 = vld [vmem:[#allocation5 + $0x264] sm:$0xf]
    %v1251 = vld [vmem:[#allocation5 + $0x268] sm:$0xff]
    %v1252 = vld [vmem:[#allocation5 + $0x270] sm:$0xff]
    %v1253 = vld [vmem:[#allocation5 + $0x278] sm:$0xff]
    %v1254 = vld [vmem:[#allocation5 + $0x280] sm:$0xf]
    %v1255 = vld [vmem:[#allocation5 + $0x284] sm:$0xff]
    %v1256 = vld [vmem:[#allocation5 + $0x28c] sm:$0xff]
    %v1257 = vld [vmem:[#allocation5 + $0x294] sm:$0xff]
    %v1258 = vld [vmem:[#allocation5 + $0x29c] sm:$0xf]
    %v1259 = vld [vmem:[#allocation5 + $0x2a0] sm:$0xff]
    %v1260 = vld [vmem:[#allocation5 + $0x2a8] sm:$0xff]
    %v1261 = vld [vmem:[#allocation5 + $0x2b0] sm:$0xff]
    %v1262 = vld [vmem:[#allocation5 + $0x2b8] sm:$0xf]
    %v1263 = vld [vmem:[#allocation5 + $0x2bc] sm:$0xff]
    %v1264 = vld [vmem:[#allocation5 + $0x2c4] sm:$0xff]
    %v1265 = vld [vmem:[#allocation5 + $0x2cc] sm:$0xff]
    %v1266 = vld [vmem:[#allocation5 + $0x2d4] sm:$0xf]
    %v1267 = vld [vmem:[#allocation5 + $0x2d8] sm:$0xff]
    %v1268 = vld [vmem:[#allocation5 + $0x2e0] sm:$0xff]
    %v1269 = vld [vmem:[#allocation5 + $0x2e8] sm:$0xff]
    %v1270 = vld [vmem:[#allocation5 + $0x2f0] sm:$0xf]
    %v1271 = vld [vmem:[#allocation5 + $0x2f4] sm:$0xff]
    %v1272 = vld [vmem:[#allocation5 + $0x2fc] sm:$0xff]
    %v1273 = vld [vmem:[#allocation5 + $0x304] sm:$0xff]
    %v1274 = vld [vmem:[#allocation5 + $0x30c] sm:$0xf]
    %v1275 = vld [vmem:[#allocation5 + $0x310] sm:$0xff]
    %v1276 = vld [vmem:[#allocation5 + $0x318] sm:$0xff]
    %v1277 = vld [vmem:[#allocation5 + $0x320] sm:$0xff]
    %v1278 = vld [vmem:[#allocation5 + $0x328] sm:$0xf]
    %v1279 = vld [vmem:[#allocation5 + $0x32c] sm:$0xff]
    %v1280 = vld [vmem:[#allocation5 + $0x334] sm:$0xff]
    %v1281 = vld [vmem:[#allocation5 + $0x33c] sm:$0xff]
    %v1282 = vld [vmem:[#allocation5 + $0x344] sm:$0xf]
    %v1283 = vld [vmem:[#allocation5 + $0x348] sm:$0xff]
    %v1284 = vld [vmem:[#allocation5 + $0x350] sm:$0xff]
    %v1285 = vld [vmem:[#allocation5 + $0x358] sm:$0xff]
    %v1286 = vld [vmem:[#allocation5 + $0x360] sm:$0xf]
    %v1287 = vld [vmem:[#allocation5 + $0x364] sm:$0xff]
    %v1288 = vld [vmem:[#allocation5 + $0x36c] sm:$0xff]
    %v1289 = vld [vmem:[#allocation5 + $0x374] sm:$0xff]
    %v1290 = vld [vmem:[#allocation5 + $0x37c] sm:$0xf]
    %v1291 = vld [vmem:[#allocation5 + $0x380] sm:$0xff]
    %v1292 = vld [vmem:[#allocation5 + $0x388] sm:$0xff]
    %v1293 = vld [vmem:[#allocation5 + $0x390] sm:$0xff]
    %v1294 = vld [vmem:[#allocation5 + $0x398] sm:$0xf]
    %v1295 = vld [vmem:[#allocation5 + $0x39c] sm:$0xff]
    %v1296 = vld [vmem:[#allocation5 + $0x3a4] sm:$0xff]
    %v1297 = vld [vmem:[#allocation5 + $0x3ac] sm:$0xff]
    %v1298 = vld [vmem:[#allocation5 + $0x3b4] sm:$0xf]
    %v1299 = vld [vmem:[#allocation5 + $0x3b8] sm:$0xff]
    %v1300 = vld [vmem:[#allocation5 + $0x3c0] sm:$0xff]
    %v1301 = vld [vmem:[#allocation5 + $0x3c8] sm:$0xff]
    %v1302 = vld [vmem:[#allocation5 + $0x3d0] sm:$0xf]
    %v1303 = vld [vmem:[#allocation5 + $0x3d4] sm:$0xff]
    %v1304 = vld [vmem:[#allocation5 + $0x3dc] sm:$0xff]
    %v1305 = vld [vmem:[#allocation5 + $0x3e4] sm:$0xff]
    %v1306 = vld [vmem:[#allocation5 + $0x3ec] sm:$0xf]
    %v1307 = vld [vmem:[#allocation5 + $0x3f0] sm:$0xff]
    %v1308 = vld [vmem:[#allocation5 + $0x3f8] sm:$0xff]
    %v1309 = vld [vmem:[#allocation5 + $0x400] sm:$0xff]
    %v1310 = vld [vmem:[#allocation5 + $0x408] sm:$0xf]
    %v1311 = vld [vmem:[#allocation5 + $0x40c] sm:$0xff]
    %v1312 = vld [vmem:[#allocation5 + $0x414] sm:$0xff]
    %v1313 = vld [vmem:[#allocation5 + $0x41c] sm:$0xff]
    %v1314 = vld [vmem:[#allocation5 + $0x424] sm:$0xf]
    %v1315 = vld [vmem:[#allocation5 + $0x428] sm:$0xff]
    %v1316 = vld [vmem:[#allocation5 + $0x430] sm:$0xff]
    %v1317 = vld [vmem:[#allocation5 + $0x438] sm:$0xff]
    %v1318 = vld [vmem:[#allocation5 + $0x440] sm:$0xf]
    %v1319 = vld [vmem:[#allocation5 + $0x444] sm:$0xff]
    %v1320 = vld [vmem:[#allocation5 + $0x44c] sm:$0xff]
    %v1321 = vld [vmem:[#allocation5 + $0x454] sm:$0xff]
    %v1322 = vld [vmem:[#allocation5 + $0x45c] sm:$0xf]
    %v1323 = vld [vmem:[#allocation5 + $0x460] sm:$0xff]
    %v1324 = vld [vmem:[#allocation5 + $0x468] sm:$0xff]
    %v1325 = vld [vmem:[#allocation5 + $0x470] sm:$0xff]
    %v1326 = vld [vmem:[#allocation5 + $0x478] sm:$0xf]
    %v1327 = vld [vmem:[#allocation5 + $0x47c] sm:$0xff]
    %v1328 = vld [vmem:[#allocation5 + $0x484] sm:$0xff]
    %v1329 = vld [vmem:[#allocation5 + $0x48c] sm:$0xff]
    %v1330 = vld [vmem:[#allocation5 + $0x494] sm:$0xf]
    %v1331 = vld [vmem:[#allocation5 + $0x498] sm:$0xff]
    %v1332 = vld [vmem:[#allocation5 + $0x4a0] sm:$0xff]
    %v1333 = vld [vmem:[#allocation5 + $0x4a8] sm:$0xff]
    %v1334 = vld [vmem:[#allocation5 + $0x4b0] sm:$0xf]
    %v1335 = vld [vmem:[#allocation5 + $0x4b4] sm:$0xff]
    %v1336 = vld [vmem:[#allocation5 + $0x4bc] sm:$0xff]
    %v1337 = vld [vmem:[#allocation5 + $0x4c4] sm:$0xff]
    %v1338 = vld [vmem:[#allocation5 + $0x4cc] sm:$0xf]
    %v1339 = vld [vmem:[#allocation5 + $0x4d0] sm:$0xff]
    %v1340 = vld [vmem:[#allocation5 + $0x4d8] sm:$0xff]
    %v1341 = vld [vmem:[#allocation5 + $0x4e0] sm:$0xff]
    %v1342 = vld [vmem:[#allocation5 + $0x4e8] sm:$0xf]
    %v1343 = vld [vmem:[#allocation5 + $0x4ec] sm:$0xff]
    %v1344 = vld [vmem:[#allocation5 + $0x4f4] sm:$0xff]
    %v1345 = vld [vmem:[#allocation5 + $0x4fc] sm:$0xff]
    %v1346 = vld [vmem:[#allocation5 + $0x504] sm:$0xf]
    %v1347 = vld [vmem:[#allocation5 + $0x508] sm:$0xff]
    %v1348 = vld [vmem:[#allocation5 + $0x510] sm:$0xff]
    %v1349 = vld [vmem:[#allocation5 + $0x518] sm:$0xff]
    %v1350 = vld [vmem:[#allocation5 + $0x520] sm:$0xf]
    %v1351 = vld [vmem:[#allocation5 + $0x524] sm:$0xff]
    %v1352 = vld [vmem:[#allocation5 + $0x52c] sm:$0xff]
    %v1353 = vld [vmem:[#allocation5 + $0x534] sm:$0xff]
    %v1354 = vld [vmem:[#allocation5 + $0x53c] sm:$0xf]
    %v1355 = vld [vmem:[#allocation5 + $0x540] sm:$0xff]
    %v1356 = vld [vmem:[#allocation5 + $0x548] sm:$0xff]
    %v1357 = vld [vmem:[#allocation5 + $0x550] sm:$0xff]
    %v1358 = vld [vmem:[#allocation5 + $0x558] sm:$0xf]
    %v1359 = vld [vmem:[#allocation5 + $0x55c] sm:$0xff]
    %v1360 = vld [vmem:[#allocation5 + $0x564] sm:$0xff]
    %v1361 = vld [vmem:[#allocation5 + $0x56c] sm:$0xff]
    %v1362 = vld [vmem:[#allocation5 + $0x574] sm:$0xf]
    %v1363 = vld [vmem:[#allocation5 + $0x578] sm:$0xff]
    %v1364 = vld [vmem:[#allocation5 + $0x580] sm:$0xff]
    %v1365 = vld [vmem:[#allocation5 + $0x588] sm:$0xff]
    %v1366 = vld [vmem:[#allocation5 + $0x590] sm:$0xf]
    %v1367 = vld [vmem:[#allocation5 + $0x594] sm:$0xff]
    %v1368 = vld [vmem:[#allocation5 + $0x59c] sm:$0xff]
    %v1369 = vld [vmem:[#allocation5 + $0x5a4] sm:$0xff]
    %v1370 = vld [vmem:[#allocation5 + $0x5ac] sm:$0xf]
    %v1371 = vld [vmem:[#allocation5 + $0x5b0] sm:$0xff]
    %v1372 = vld [vmem:[#allocation5 + $0x5b8] sm:$0xff]
    %v1373 = vld [vmem:[#allocation5 + $0x5c0] sm:$0xff]
    %v1374 = vld [vmem:[#allocation5 + $0x5c8] sm:$0xf]
    %v1375 = vld [vmem:[#allocation5 + $0x5cc] sm:$0xff]
    %v1376 = vld [vmem:[#allocation5 + $0x5d4] sm:$0xff]
    %v1377 = vld [vmem:[#allocation5 + $0x5dc] sm:$0xff]
    %v1378 = vld [vmem:[#allocation5 + $0x5e4] sm:$0xf]
    %v1379 = vld [vmem:[#allocation5 + $0x5e8] sm:$0xff]
    %v1380 = vld [vmem:[#allocation5 + $0x5f0] sm:$0xff]
    %v1381 = vld [vmem:[#allocation5 + $0x5f8] sm:$0xff]
    %v1382 = vld [vmem:[#allocation5 + $0x600] sm:$0xf]
    %v1383 = vld [vmem:[#allocation5 + $0x604] sm:$0xff]
    %v1384 = vld [vmem:[#allocation5 + $0x60c] sm:$0xff]
    %v1385 = vld [vmem:[#allocation5 + $0x614] sm:$0xff]
    %v1386 = vld [vmem:[#allocation5 + $0x61c] sm:$0xf]
    %v1387 = vld [vmem:[#allocation5 + $0x620] sm:$0xff]
    %v1388 = vld [vmem:[#allocation5 + $0x628] sm:$0xff]
    %v1389 = vld [vmem:[#allocation5 + $0x630] sm:$0xff]
    %v1390 = vld [vmem:[#allocation5 + $0x638] sm:$0xf]
    %v1391 = vld [vmem:[#allocation5 + $0x63c] sm:$0xff]
    %v1392 = vld [vmem:[#allocation5 + $0x644] sm:$0xff]
    %v1393 = vld [vmem:[#allocation5 + $0x64c] sm:$0xff]
    %v1394 = vld [vmem:[#allocation5 + $0x654] sm:$0xf]
    %v1395 = vld [vmem:[#allocation5 + $0x658] sm:$0xff]
    %v1396 = vld [vmem:[#allocation5 + $0x660] sm:$0xff]
    %v1397 = vld [vmem:[#allocation5 + $0x668] sm:$0xff]
    %v1398 = vld [vmem:[#allocation5 + $0x670] sm:$0xf]
    %v1399 = vld [vmem:[#allocation5 + $0x674] sm:$0xff]
    %v1400 = vld [vmem:[#allocation5 + $0x67c] sm:$0xff]
    %v1401 = vld [vmem:[#allocation5 + $0x684] sm:$0xff]
    %v1402 = vld [vmem:[#allocation5 + $0x68c] sm:$0xf]
    %v1403 = vld [vmem:[#allocation5 + $0x690] sm:$0xff]
    %v1404 = vld [vmem:[#allocation5 + $0x698] sm:$0xff]
    %v1405 = vld [vmem:[#allocation5 + $0x6a0] sm:$0xff]
    %v1406 = vld [vmem:[#allocation5 + $0x6a8] sm:$0xf]
    %v1407 = vld [vmem:[#allocation5 + $0x6ac] sm:$0xff]
    %v1408 = vld [vmem:[#allocation5 + $0x6b4] sm:$0xff]
    %v1409 = vld [vmem:[#allocation5 + $0x6bc] sm:$0xff]
    %v1410 = vld [vmem:[#allocation5 + $0x6c4] sm:$0xf]
    %v1411 = vld [vmem:[#allocation5 + $0x6c8] sm:$0xff]
    %v1412 = vld [vmem:[#allocation5 + $0x6d0] sm:$0xff]
    %v1413 = vld [vmem:[#allocation5 + $0x6d8] sm:$0xff]
    %v1414 = vld [vmem:[#allocation5 + $0x6e0] sm:$0xf]
    %v1415 = vld [vmem:[#allocation5 + $0x6e4] sm:$0xff]
    %v1416 = vld [vmem:[#allocation5 + $0x6ec] sm:$0xff]
    %v1417 = vld [vmem:[#allocation5 + $0x6f4] sm:$0xff]
    %v1418 = vld [vmem:[#allocation5 + $0x6fc] sm:$0xf]
    %v1419 = vpack.c.bf16 %v1147, %v1147
    %v1420 = vpack.c.bf16 %v1148, %v1148
    %v1421 = vpack.c.bf16 %v1149, %v1149
    %v1422 = vpack.c.bf16 %v1150, %v1150
    %v1679 = vunpack.c.l.b16 %v1163
    %v1680 = vunpack.c.h.b16 %v1163
    %v1681 = vunpack.c.l.b16 %v1164
    %v1682 = vunpack.c.h.b16 %v1164
    %v1683 = vunpack.c.l.b16 %v1165
    %v1684 = vunpack.c.h.b16 %v1165
    %v1685 = vunpack.c.l.b16 %v1166
    %v1686 = vunpack.c.l.b16 %v1167
    %v1687 = vunpack.c.h.b16 %v1167
    %v1688 = vunpack.c.l.b16 %v1168
    %v1689 = vunpack.c.h.b16 %v1168
    %v1690 = vunpack.c.l.b16 %v1169
    %v1691 = vunpack.c.h.b16 %v1169
    %v1692 = vunpack.c.l.b16 %v1170
    %v1693 = vunpack.c.l.b16 %v1171
    %v1694 = vunpack.c.h.b16 %v1171
    %v1695 = vunpack.c.l.b16 %v1172
    %v1696 = vunpack.c.h.b16 %v1172
    %v1697 = vunpack.c.l.b16 %v1173
    %v1698 = vunpack.c.h.b16 %v1173
    %v1699 = vunpack.c.l.b16 %v1174
    %v1700 = vunpack.c.l.b16 %v1175
    %v1701 = vunpack.c.h.b16 %v1175
    %v1702 = vunpack.c.l.b16 %v1176
    %v1703 = vunpack.c.h.b16 %v1176
    %v1704 = vunpack.c.l.b16 %v1177
    %v1705 = vunpack.c.h.b16 %v1177
    %v1706 = vunpack.c.l.b16 %v1178
    %v1707 = vunpack.c.l.b16 %v1179
    %v1708 = vunpack.c.h.b16 %v1179
    %v1709 = vunpack.c.l.b16 %v1180
    %v1710 = vunpack.c.h.b16 %v1180
    %v1711 = vunpack.c.l.b16 %v1181
    %v1712 = vunpack.c.h.b16 %v1181
    %v1713 = vunpack.c.l.b16 %v1182
    %v1714 = vunpack.c.l.b16 %v1183
    %v1715 = vunpack.c.h.b16 %v1183
    %v1716 = vunpack.c.l.b16 %v1184
    %v1717 = vunpack.c.h.b16 %v1184
    %v1718 = vunpack.c.l.b16 %v1185
    %v1719 = vunpack.c.h.b16 %v1185
    %v1720 = vunpack.c.l.b16 %v1186
    %v1721 = vunpack.c.l.b16 %v1187
    %v1722 = vunpack.c.h.b16 %v1187
    %v1723 = vunpack.c.l.b16 %v1188
    %v1724 = vunpack.c.h.b16 %v1188
    %v1725 = vunpack.c.l.b16 %v1189
    %v1726 = vunpack.c.h.b16 %v1189
    %v1727 = vunpack.c.l.b16 %v1190
    %v1728 = vunpack.c.l.b16 %v1191
    %v1729 = vunpack.c.h.b16 %v1191
    %v1730 = vunpack.c.l.b16 %v1192
    %v1731 = vunpack.c.h.b16 %v1192
    %v1732 = vunpack.c.l.b16 %v1193
    %v1733 = vunpack.c.h.b16 %v1193
    %v1734 = vunpack.c.l.b16 %v1194
    %v1735 = vunpack.c.l.b16 %v1195
    %v1736 = vunpack.c.h.b16 %v1195
    %v1737 = vunpack.c.l.b16 %v1196
    %v1738 = vunpack.c.h.b16 %v1196
    %v1739 = vunpack.c.l.b16 %v1197
    %v1740 = vunpack.c.h.b16 %v1197
    %v1741 = vunpack.c.l.b16 %v1198
    %v1742 = vunpack.c.l.b16 %v1199
    %v1743 = vunpack.c.h.b16 %v1199
    %v1744 = vunpack.c.l.b16 %v1200
    %v1745 = vunpack.c.h.b16 %v1200
    %v1746 = vunpack.c.l.b16 %v1201
    %v1747 = vunpack.c.h.b16 %v1201
    %v1748 = vunpack.c.l.b16 %v1202
    %v1749 = vunpack.c.l.b16 %v1203
    %v1750 = vunpack.c.h.b16 %v1203
    %v1751 = vunpack.c.l.b16 %v1204
    %v1752 = vunpack.c.h.b16 %v1204
    %v1753 = vunpack.c.l.b16 %v1205
    %v1754 = vunpack.c.h.b16 %v1205
    %v1755 = vunpack.c.l.b16 %v1206
    %v1756 = vunpack.c.l.b16 %v1207
    %v1757 = vunpack.c.h.b16 %v1207
    %v1758 = vunpack.c.l.b16 %v1208
    %v1759 = vunpack.c.h.b16 %v1208
    %v1760 = vunpack.c.l.b16 %v1209
    %v1761 = vunpack.c.h.b16 %v1209
    %v1762 = vunpack.c.l.b16 %v1210
    %v1763 = vunpack.c.l.b16 %v1211
    %v1764 = vunpack.c.h.b16 %v1211
    %v1765 = vunpack.c.l.b16 %v1212
    %v1766 = vunpack.c.h.b16 %v1212
    %v1767 = vunpack.c.l.b16 %v1213
    %v1768 = vunpack.c.h.b16 %v1213
    %v1769 = vunpack.c.l.b16 %v1214
    %v1770 = vunpack.c.l.b16 %v1215
    %v1771 = vunpack.c.h.b16 %v1215
    %v1772 = vunpack.c.l.b16 %v1216
    %v1773 = vunpack.c.h.b16 %v1216
    %v1774 = vunpack.c.l.b16 %v1217
    %v1775 = vunpack.c.h.b16 %v1217
    %v1776 = vunpack.c.l.b16 %v1218
    %v1777 = vunpack.c.l.b16 %v1219
    %v1778 = vunpack.c.h.b16 %v1219
    %v1779 = vunpack.c.l.b16 %v1220
    %v1780 = vunpack.c.h.b16 %v1220
    %v1781 = vunpack.c.l.b16 %v1221
    %v1782 = vunpack.c.h.b16 %v1221
    %v1783 = vunpack.c.l.b16 %v1222
    %v1784 = vunpack.c.l.b16 %v1223
    %v1785 = vunpack.c.h.b16 %v1223
    %v1786 = vunpack.c.l.b16 %v1224
    %v1787 = vunpack.c.h.b16 %v1224
    %v1788 = vunpack.c.l.b16 %v1225
    %v1789 = vunpack.c.h.b16 %v1225
    %v1790 = vunpack.c.l.b16 %v1226
    %v1791 = vunpack.c.l.b16 %v1227
    %v1792 = vunpack.c.h.b16 %v1227
    %v1793 = vunpack.c.l.b16 %v1228
    %v1794 = vunpack.c.h.b16 %v1228
    %v1795 = vunpack.c.l.b16 %v1229
    %v1796 = vunpack.c.h.b16 %v1229
    %v1797 = vunpack.c.l.b16 %v1230
    %v1798 = vunpack.c.l.b16 %v1231
    %v1799 = vunpack.c.h.b16 %v1231
    %v1800 = vunpack.c.l.b16 %v1232
    %v1801 = vunpack.c.h.b16 %v1232
    %v1802 = vunpack.c.l.b16 %v1233
    %v1803 = vunpack.c.h.b16 %v1233
    %v1804 = vunpack.c.l.b16 %v1234
    %v1805 = vunpack.c.l.b16 %v1235
    %v1806 = vunpack.c.h.b16 %v1235
    %v1807 = vunpack.c.l.b16 %v1236
    %v1808 = vunpack.c.h.b16 %v1236
    %v1809 = vunpack.c.l.b16 %v1237
    %v1810 = vunpack.c.h.b16 %v1237
    %v1811 = vunpack.c.l.b16 %v1238
    %v1812 = vunpack.c.l.b16 %v1239
    %v1813 = vunpack.c.h.b16 %v1239
    %v1814 = vunpack.c.l.b16 %v1240
    %v1815 = vunpack.c.h.b16 %v1240
    %v1816 = vunpack.c.l.b16 %v1241
    %v1817 = vunpack.c.h.b16 %v1241
    %v1818 = vunpack.c.l.b16 %v1242
    %v1819 = vunpack.c.l.b16 %v1243
    %v1820 = vunpack.c.h.b16 %v1243
    %v1821 = vunpack.c.l.b16 %v1244
    %v1822 = vunpack.c.h.b16 %v1244
    %v1823 = vunpack.c.l.b16 %v1245
    %v1824 = vunpack.c.h.b16 %v1245
    %v1825 = vunpack.c.l.b16 %v1246
    %v1826 = vunpack.c.l.b16 %v1247
    %v1827 = vunpack.c.h.b16 %v1247
    %v1828 = vunpack.c.l.b16 %v1248
    %v1829 = vunpack.c.h.b16 %v1248
    %v1830 = vunpack.c.l.b16 %v1249
    %v1831 = vunpack.c.h.b16 %v1249
    %v1832 = vunpack.c.l.b16 %v1250
    %v1833 = vunpack.c.l.b16 %v1251
    %v1834 = vunpack.c.h.b16 %v1251
    %v1835 = vunpack.c.l.b16 %v1252
    %v1836 = vunpack.c.h.b16 %v1252
    %v1837 = vunpack.c.l.b16 %v1253
    %v1838 = vunpack.c.h.b16 %v1253
    %v1839 = vunpack.c.l.b16 %v1254
    %v1840 = vunpack.c.l.b16 %v1255
    %v1841 = vunpack.c.h.b16 %v1255
    %v1842 = vunpack.c.l.b16 %v1256
    %v1843 = vunpack.c.h.b16 %v1256
    %v1844 = vunpack.c.l.b16 %v1257
    %v1845 = vunpack.c.h.b16 %v1257
    %v1846 = vunpack.c.l.b16 %v1258
    %v1847 = vunpack.c.l.b16 %v1259
    %v1848 = vunpack.c.h.b16 %v1259
    %v1849 = vunpack.c.l.b16 %v1260
    %v1850 = vunpack.c.h.b16 %v1260
    %v1851 = vunpack.c.l.b16 %v1261
    %v1852 = vunpack.c.h.b16 %v1261
    %v1853 = vunpack.c.l.b16 %v1262
    %v1854 = vunpack.c.l.b16 %v1263
    %v1855 = vunpack.c.h.b16 %v1263
    %v1856 = vunpack.c.l.b16 %v1264
    %v1857 = vunpack.c.h.b16 %v1264
    %v1858 = vunpack.c.l.b16 %v1265
    %v1859 = vunpack.c.h.b16 %v1265
    %v1860 = vunpack.c.l.b16 %v1266
    %v1861 = vunpack.c.l.b16 %v1267
    %v1862 = vunpack.c.h.b16 %v1267
    %v1863 = vunpack.c.l.b16 %v1268
    %v1864 = vunpack.c.h.b16 %v1268
    %v1865 = vunpack.c.l.b16 %v1269
    %v1866 = vunpack.c.h.b16 %v1269
    %v1867 = vunpack.c.l.b16 %v1270
    %v1868 = vunpack.c.l.b16 %v1271
    %v1869 = vunpack.c.h.b16 %v1271
    %v1870 = vunpack.c.l.b16 %v1272
    %v1871 = vunpack.c.h.b16 %v1272
    %v1872 = vunpack.c.l.b16 %v1273
    %v1873 = vunpack.c.h.b16 %v1273
    %v1874 = vunpack.c.l.b16 %v1274
    %v1875 = vunpack.c.l.b16 %v1275
    %v1876 = vunpack.c.h.b16 %v1275
    %v1877 = vunpack.c.l.b16 %v1276
    %v1878 = vunpack.c.h.b16 %v1276
    %v1879 = vunpack.c.l.b16 %v1277
    %v1880 = vunpack.c.h.b16 %v1277
    %v1881 = vunpack.c.l.b16 %v1278
    %v1882 = vunpack.c.l.b16 %v1279
    %v1883 = vunpack.c.h.b16 %v1279
    %v1884 = vunpack.c.l.b16 %v1280
    %v1885 = vunpack.c.h.b16 %v1280
    %v1886 = vunpack.c.l.b16 %v1281
    %v1887 = vunpack.c.h.b16 %v1281
    %v1888 = vunpack.c.l.b16 %v1282
    %v1889 = vunpack.c.l.b16 %v1283
    %v1890 = vunpack.c.h.b16 %v1283
    %v1891 = vunpack.c.l.b16 %v1284
    %v1892 = vunpack.c.h.b16 %v1284
    %v1893 = vunpack.c.l.b16 %v1285
    %v1894 = vunpack.c.h.b16 %v1285
    %v1895 = vunpack.c.l.b16 %v1286
    %v1896 = vunpack.c.l.b16 %v1287
    %v1897 = vunpack.c.h.b16 %v1287
    %v1898 = vunpack.c.l.b16 %v1288
    %v1899 = vunpack.c.h.b16 %v1288
    %v1900 = vunpack.c.l.b16 %v1289
    %v1901 = vunpack.c.h.b16 %v1289
    %v1902 = vunpack.c.l.b16 %v1290
    %v1903 = vunpack.c.l.b16 %v1291
    %v1904 = vunpack.c.h.b16 %v1291
    %v1905 = vunpack.c.l.b16 %v1292
    %v1906 = vunpack.c.h.b16 %v1292
    %v1907 = vunpack.c.l.b16 %v1293
    %v1908 = vunpack.c.h.b16 %v1293
    %v1909 = vunpack.c.l.b16 %v1294
    %v1910 = vunpack.c.l.b16 %v1295
    %v1911 = vunpack.c.h.b16 %v1295
    %v1912 = vunpack.c.l.b16 %v1296
    %v1913 = vunpack.c.h.b16 %v1296
    %v1914 = vunpack.c.l.b16 %v1297
    %v1915 = vunpack.c.h.b16 %v1297
    %v1916 = vunpack.c.l.b16 %v1298
    %v1917 = vunpack.c.l.b16 %v1299
    %v1918 = vunpack.c.h.b16 %v1299
    %v1919 = vunpack.c.l.b16 %v1300
    %v1920 = vunpack.c.h.b16 %v1300
    %v1921 = vunpack.c.l.b16 %v1301
    %v1922 = vunpack.c.h.b16 %v1301
    %v1923 = vunpack.c.l.b16 %v1302
    %v1924 = vunpack.c.l.b16 %v1303
    %v1925 = vunpack.c.h.b16 %v1303
    %v1926 = vunpack.c.l.b16 %v1304
    %v1927 = vunpack.c.h.b16 %v1304
    %v1928 = vunpack.c.l.b16 %v1305
    %v1929 = vunpack.c.h.b16 %v1305
    %v1930 = vunpack.c.l.b16 %v1306
    %v1931 = vunpack.c.l.b16 %v1307
    %v1932 = vunpack.c.h.b16 %v1307
    %v1933 = vunpack.c.l.b16 %v1308
    %v1934 = vunpack.c.h.b16 %v1308
    %v1935 = vunpack.c.l.b16 %v1309
    %v1936 = vunpack.c.h.b16 %v1309
    %v1937 = vunpack.c.l.b16 %v1310
    %v1938 = vunpack.c.l.b16 %v1311
    %v1939 = vunpack.c.h.b16 %v1311
    %v1940 = vunpack.c.l.b16 %v1312
    %v1941 = vunpack.c.h.b16 %v1312
    %v1942 = vunpack.c.l.b16 %v1313
    %v1943 = vunpack.c.h.b16 %v1313
    %v1944 = vunpack.c.l.b16 %v1314
    %v1945 = vunpack.c.l.b16 %v1315
    %v1946 = vunpack.c.h.b16 %v1315
    %v1947 = vunpack.c.l.b16 %v1316
    %v1948 = vunpack.c.h.b16 %v1316
    %v1949 = vunpack.c.l.b16 %v1317
    %v1950 = vunpack.c.h.b16 %v1317
    %v1951 = vunpack.c.l.b16 %v1318
    %v1952 = vunpack.c.l.b16 %v1319
    %v1953 = vunpack.c.h.b16 %v1319
    %v1954 = vunpack.c.l.b16 %v1320
    %v1955 = vunpack.c.h.b16 %v1320
    %v1956 = vunpack.c.l.b16 %v1321
    %v1957 = vunpack.c.h.b16 %v1321
    %v1958 = vunpack.c.l.b16 %v1322
    %v1959 = vunpack.c.l.b16 %v1323
    %v1960 = vunpack.c.h.b16 %v1323
    %v1961 = vunpack.c.l.b16 %v1324
    %v1962 = vunpack.c.h.b16 %v1324
    %v1963 = vunpack.c.l.b16 %v1325
    %v1964 = vunpack.c.h.b16 %v1325
    %v1965 = vunpack.c.l.b16 %v1326
    %v1966 = vunpack.c.l.b16 %v1327
    %v1967 = vunpack.c.h.b16 %v1327
    %v1968 = vunpack.c.l.b16 %v1328
    %v1969 = vunpack.c.h.b16 %v1328
    %v1970 = vunpack.c.l.b16 %v1329
    %v1971 = vunpack.c.h.b16 %v1329
    %v1972 = vunpack.c.l.b16 %v1330
    %v1973 = vunpack.c.l.b16 %v1331
    %v1974 = vunpack.c.h.b16 %v1331
    %v1975 = vunpack.c.l.b16 %v1332
    %v1976 = vunpack.c.h.b16 %v1332
    %v1977 = vunpack.c.l.b16 %v1333
    %v1978 = vunpack.c.h.b16 %v1333
    %v1979 = vunpack.c.l.b16 %v1334
    %v1980 = vunpack.c.l.b16 %v1335
    %v1981 = vunpack.c.h.b16 %v1335
    %v1982 = vunpack.c.l.b16 %v1336
    %v1983 = vunpack.c.h.b16 %v1336
    %v1984 = vunpack.c.l.b16 %v1337
    %v1985 = vunpack.c.h.b16 %v1337
    %v1986 = vunpack.c.l.b16 %v1338
    %v1987 = vunpack.c.l.b16 %v1339
    %v1988 = vunpack.c.h.b16 %v1339
    %v1989 = vunpack.c.l.b16 %v1340
    %v1990 = vunpack.c.h.b16 %v1340
    %v1991 = vunpack.c.l.b16 %v1341
    %v1992 = vunpack.c.h.b16 %v1341
    %v1993 = vunpack.c.l.b16 %v1342
    %v1994 = vunpack.c.l.b16 %v1343
    %v1995 = vunpack.c.h.b16 %v1343
    %v1996 = vunpack.c.l.b16 %v1344
    %v1997 = vunpack.c.h.b16 %v1344
    %v1998 = vunpack.c.l.b16 %v1345
    %v1999 = vunpack.c.h.b16 %v1345
    %v2000 = vunpack.c.l.b16 %v1346
    %v2001 = vunpack.c.l.b16 %v1347
    %v2002 = vunpack.c.h.b16 %v1347
    %v2003 = vunpack.c.l.b16 %v1348
    %v2004 = vunpack.c.h.b16 %v1348
    %v2005 = vunpack.c.l.b16 %v1349
    %v2006 = vunpack.c.h.b16 %v1349
    %v2007 = vunpack.c.l.b16 %v1350
    %v2008 = vunpack.c.l.b16 %v1351
    %v2009 = vunpack.c.h.b16 %v1351
    %v2010 = vunpack.c.l.b16 %v1352
    %v2011 = vunpack.c.h.b16 %v1352
    %v2012 = vunpack.c.l.b16 %v1353
    %v2013 = vunpack.c.h.b16 %v1353
    %v2014 = vunpack.c.l.b16 %v1354
    %v2015 = vunpack.c.l.b16 %v1355
    %v2016 = vunpack.c.h.b16 %v1355
    %v2017 = vunpack.c.l.b16 %v1356
    %v2018 = vunpack.c.h.b16 %v1356
    %v2019 = vunpack.c.l.b16 %v1357
    %v2020 = vunpack.c.h.b16 %v1357
    %v2021 = vunpack.c.l.b16 %v1358
    %v2022 = vunpack.c.l.b16 %v1359
    %v2023 = vunpack.c.h.b16 %v1359
    %v2024 = vunpack.c.l.b16 %v1360
    %v2025 = vunpack.c.h.b16 %v1360
    %v2026 = vunpack.c.l.b16 %v1361
    %v2027 = vunpack.c.h.b16 %v1361
    %v2028 = vunpack.c.l.b16 %v1362
    %v2029 = vunpack.c.l.b16 %v1363
    %v2030 = vunpack.c.h.b16 %v1363
    %v2031 = vunpack.c.l.b16 %v1364
    %v2032 = vunpack.c.h.b16 %v1364
    %v2033 = vunpack.c.l.b16 %v1365
    %v2034 = vunpack.c.h.b16 %v1365
    %v2035 = vunpack.c.l.b16 %v1366
    %v2036 = vunpack.c.l.b16 %v1367
    %v2037 = vunpack.c.h.b16 %v1367
    %v2038 = vunpack.c.l.b16 %v1368
    %v2039 = vunpack.c.h.b16 %v1368
    %v2040 = vunpack.c.l.b16 %v1369
    %v2041 = vunpack.c.h.b16 %v1369
    %v2042 = vunpack.c.l.b16 %v1370
    %v2043 = vunpack.c.l.b16 %v1371
    %v2044 = vunpack.c.h.b16 %v1371
    %v2045 = vunpack.c.l.b16 %v1372
    %v2046 = vunpack.c.h.b16 %v1372
    %v2047 = vunpack.c.l.b16 %v1373
    %v2048 = vunpack.c.h.b16 %v1373
    %v2049 = vunpack.c.l.b16 %v1374
    %v2050 = vunpack.c.l.b16 %v1375
    %v2051 = vunpack.c.h.b16 %v1375
    %v2052 = vunpack.c.l.b16 %v1376
    %v2053 = vunpack.c.h.b16 %v1376
    %v2054 = vunpack.c.l.b16 %v1377
    %v2055 = vunpack.c.h.b16 %v1377
    %v2056 = vunpack.c.l.b16 %v1378
    %v2057 = vunpack.c.l.b16 %v1379
    %v2058 = vunpack.c.h.b16 %v1379
    %v2059 = vunpack.c.l.b16 %v1380
    %v2060 = vunpack.c.h.b16 %v1380
    %v2061 = vunpack.c.l.b16 %v1381
    %v2062 = vunpack.c.h.b16 %v1381
    %v2063 = vunpack.c.l.b16 %v1382
    %v2064 = vunpack.c.l.b16 %v1383
    %v2065 = vunpack.c.h.b16 %v1383
    %v2066 = vunpack.c.l.b16 %v1384
    %v2067 = vunpack.c.h.b16 %v1384
    %v2068 = vunpack.c.l.b16 %v1385
    %v2069 = vunpack.c.h.b16 %v1385
    %v2070 = vunpack.c.l.b16 %v1386
    %v2071 = vunpack.c.l.b16 %v1387
    %v2072 = vunpack.c.h.b16 %v1387
    %v2073 = vunpack.c.l.b16 %v1388
    %v2074 = vunpack.c.h.b16 %v1388
    %v2075 = vunpack.c.l.b16 %v1389
    %v2076 = vunpack.c.h.b16 %v1389
    %v2077 = vunpack.c.l.b16 %v1390
    %v2078 = vunpack.c.l.b16 %v1391
    %v2079 = vunpack.c.h.b16 %v1391
    %v2080 = vunpack.c.l.b16 %v1392
    %v2081 = vunpack.c.h.b16 %v1392
    %v2082 = vunpack.c.l.b16 %v1393
    %v2083 = vunpack.c.h.b16 %v1393
    %v2084 = vunpack.c.l.b16 %v1394
    %v2085 = vunpack.c.l.b16 %v1395
    %v2086 = vunpack.c.h.b16 %v1395
    %v2087 = vunpack.c.l.b16 %v1396
    %v2088 = vunpack.c.h.b16 %v1396
    %v2089 = vunpack.c.l.b16 %v1397
    %v2090 = vunpack.c.h.b16 %v1397
    %v2091 = vunpack.c.l.b16 %v1398
    %v2092 = vunpack.c.l.b16 %v1399
    %v2093 = vunpack.c.h.b16 %v1399
    %v2094 = vunpack.c.l.b16 %v1400
    %v2095 = vunpack.c.h.b16 %v1400
    %v2096 = vunpack.c.l.b16 %v1401
    %v2097 = vunpack.c.h.b16 %v1401
    %v2098 = vunpack.c.l.b16 %v1402
    %v2099 = vunpack.c.l.b16 %v1403
    %v2100 = vunpack.c.h.b16 %v1403
    %v2101 = vunpack.c.l.b16 %v1404
    %v2102 = vunpack.c.h.b16 %v1404
    %v2103 = vunpack.c.l.b16 %v1405
    %v2104 = vunpack.c.h.b16 %v1405
    %v2105 = vunpack.c.l.b16 %v1406
    %v2106 = vunpack.c.l.b16 %v1407
    %v2107 = vunpack.c.h.b16 %v1407
    %v2108 = vunpack.c.l.b16 %v1408
    %v2109 = vunpack.c.h.b16 %v1408
    %v2110 = vunpack.c.l.b16 %v1409
    %v2111 = vunpack.c.h.b16 %v1409
    %v2112 = vunpack.c.l.b16 %v1410
    %v2113 = vunpack.c.l.b16 %v1411
    %v2114 = vunpack.c.h.b16 %v1411
    %v2115 = vunpack.c.l.b16 %v1412
    %v2116 = vunpack.c.h.b16 %v1412
    %v2117 = vunpack.c.l.b16 %v1413
    %v2118 = vunpack.c.h.b16 %v1413
    %v2119 = vunpack.c.l.b16 %v1414
    %v2120 = vunpack.c.l.b16 %v1415
    %v2121 = vunpack.c.h.b16 %v1415
    %v2122 = vunpack.c.l.b16 %v1416
    %v2123 = vunpack.c.h.b16 %v1416
    %v2124 = vunpack.c.l.b16 %v1417
    %v2125 = vunpack.c.h.b16 %v1417
    %v2126 = vunpack.c.l.b16 %v1418
    %v2127 = vpack.c.b16 %v1686, %v1679
    %v2128 = vpack.c.b16 %v1687, %v1680
    %v2129 = vpack.c.b16 %v1688, %v1681
    %v2130 = vpack.c.b16 %v1689, %v1682
    %v2131 = vpack.c.b16 %v1690, %v1683
    %v2132 = vpack.c.b16 %v1691, %v1684
    %v2133 = vpack.c.b16 %v1692, %v1685
    %v2134 = vpack.c.b16 %v1700, %v1693
    %v2135 = vpack.c.b16 %v1701, %v1694
    %v2136 = vpack.c.b16 %v1702, %v1695
    %v2137 = vpack.c.b16 %v1703, %v1696
    %v2138 = vpack.c.b16 %v1704, %v1697
    %v2139 = vpack.c.b16 %v1705, %v1698
    %v2140 = vpack.c.b16 %v1706, %v1699
    %v2141 = vpack.c.b16 %v1714, %v1707
    %v2142 = vpack.c.b16 %v1715, %v1708
    %v2143 = vpack.c.b16 %v1716, %v1709
    %v2144 = vpack.c.b16 %v1717, %v1710
    %v2145 = vpack.c.b16 %v1718, %v1711
    %v2146 = vpack.c.b16 %v1719, %v1712
    %v2147 = vpack.c.b16 %v1720, %v1713
    %v2148 = vpack.c.b16 %v1728, %v1721
    %v2149 = vpack.c.b16 %v1729, %v1722
    %v2150 = vpack.c.b16 %v1730, %v1723
    %v2151 = vpack.c.b16 %v1731, %v1724
    %v2152 = vpack.c.b16 %v1732, %v1725
    %v2153 = vpack.c.b16 %v1733, %v1726
    %v2154 = vpack.c.b16 %v1734, %v1727
    %v2155 = vpack.c.b16 %v1742, %v1735
    %v2156 = vpack.c.b16 %v1743, %v1736
    %v2157 = vpack.c.b16 %v1744, %v1737
    %v2158 = vpack.c.b16 %v1745, %v1738
    %v2159 = vpack.c.b16 %v1746, %v1739
    %v2160 = vpack.c.b16 %v1747, %v1740
    %v2161 = vpack.c.b16 %v1748, %v1741
    %v2162 = vpack.c.b16 %v1756, %v1749
    %v2163 = vpack.c.b16 %v1757, %v1750
    %v2164 = vpack.c.b16 %v1758, %v1751
    %v2165 = vpack.c.b16 %v1759, %v1752
    %v2166 = vpack.c.b16 %v1760, %v1753
    %v2167 = vpack.c.b16 %v1761, %v1754
    %v2168 = vpack.c.b16 %v1762, %v1755
    %v2169 = vpack.c.b16 %v1770, %v1763
    %v2170 = vpack.c.b16 %v1771, %v1764
    %v2171 = vpack.c.b16 %v1772, %v1765
    %v2172 = vpack.c.b16 %v1773, %v1766
    %v2173 = vpack.c.b16 %v1774, %v1767
    %v2174 = vpack.c.b16 %v1775, %v1768
    %v2175 = vpack.c.b16 %v1776, %v1769
    %v2176 = vpack.c.b16 %v1784, %v1777
    %v2177 = vpack.c.b16 %v1785, %v1778
    %v2178 = vpack.c.b16 %v1786, %v1779
    %v2179 = vpack.c.b16 %v1787, %v1780
    %v2180 = vpack.c.b16 %v1788, %v1781
    %v2181 = vpack.c.b16 %v1789, %v1782
    %v2182 = vpack.c.b16 %v1790, %v1783
    %v2183 = vpack.c.b16 %v1798, %v1791
    %v2184 = vpack.c.b16 %v1799, %v1792
    %v2185 = vpack.c.b16 %v1800, %v1793
    %v2186 = vpack.c.b16 %v1801, %v1794
    %v2187 = vpack.c.b16 %v1802, %v1795
    %v2188 = vpack.c.b16 %v1803, %v1796
    %v2189 = vpack.c.b16 %v1804, %v1797
    %v2190 = vpack.c.b16 %v1812, %v1805
    %v2191 = vpack.c.b16 %v1813, %v1806
    %v2192 = vpack.c.b16 %v1814, %v1807
    %v2193 = vpack.c.b16 %v1815, %v1808
    %v2194 = vpack.c.b16 %v1816, %v1809
    %v2195 = vpack.c.b16 %v1817, %v1810
    %v2196 = vpack.c.b16 %v1818, %v1811
    %v2197 = vpack.c.b16 %v1826, %v1819
    %v2198 = vpack.c.b16 %v1827, %v1820
    %v2199 = vpack.c.b16 %v1828, %v1821
    %v2200 = vpack.c.b16 %v1829, %v1822
    %v2201 = vpack.c.b16 %v1830, %v1823
    %v2202 = vpack.c.b16 %v1831, %v1824
    %v2203 = vpack.c.b16 %v1832, %v1825
    %v2204 = vpack.c.b16 %v1840, %v1833
    %v2205 = vpack.c.b16 %v1841, %v1834
    %v2206 = vpack.c.b16 %v1842, %v1835
    %v2207 = vpack.c.b16 %v1843, %v1836
    %v2208 = vpack.c.b16 %v1844, %v1837
    %v2209 = vpack.c.b16 %v1845, %v1838
    %v2210 = vpack.c.b16 %v1846, %v1839
    %v2211 = vpack.c.b16 %v1854, %v1847
    %v2212 = vpack.c.b16 %v1855, %v1848
    %v2213 = vpack.c.b16 %v1856, %v1849
    %v2214 = vpack.c.b16 %v1857, %v1850
    %v2215 = vpack.c.b16 %v1858, %v1851
    %v2216 = vpack.c.b16 %v1859, %v1852
    %v2217 = vpack.c.b16 %v1860, %v1853
    %v2218 = vpack.c.b16 %v1868, %v1861
    %v2219 = vpack.c.b16 %v1869, %v1862
    %v2220 = vpack.c.b16 %v1870, %v1863
    %v2221 = vpack.c.b16 %v1871, %v1864
    %v2222 = vpack.c.b16 %v1872, %v1865
    %v2223 = vpack.c.b16 %v1873, %v1866
    %v2224 = vpack.c.b16 %v1874, %v1867
    %v2225 = vpack.c.b16 %v1882, %v1875
    %v2226 = vpack.c.b16 %v1883, %v1876
    %v2227 = vpack.c.b16 %v1884, %v1877
    %v2228 = vpack.c.b16 %v1885, %v1878
    %v2229 = vpack.c.b16 %v1886, %v1879
    %v2230 = vpack.c.b16 %v1887, %v1880
    %v2231 = vpack.c.b16 %v1888, %v1881
    %v2232 = vpack.c.b16 %v1896, %v1889
    %v2233 = vpack.c.b16 %v1897, %v1890
    %v2234 = vpack.c.b16 %v1898, %v1891
    %v2235 = vpack.c.b16 %v1899, %v1892
    %v2236 = vpack.c.b16 %v1900, %v1893
    %v2237 = vpack.c.b16 %v1901, %v1894
    %v2238 = vpack.c.b16 %v1902, %v1895
    %v2239 = vpack.c.b16 %v1910, %v1903
    %v2240 = vpack.c.b16 %v1911, %v1904
    %v2241 = vpack.c.b16 %v1912, %v1905
    %v2242 = vpack.c.b16 %v1913, %v1906
    %v2243 = vpack.c.b16 %v1914, %v1907
    %v2244 = vpack.c.b16 %v1915, %v1908
    %v2245 = vpack.c.b16 %v1916, %v1909
    %v2246 = vpack.c.b16 %v1924, %v1917
    %v2247 = vpack.c.b16 %v1925, %v1918
    %v2248 = vpack.c.b16 %v1926, %v1919
    %v2249 = vpack.c.b16 %v1927, %v1920
    %v2250 = vpack.c.b16 %v1928, %v1921
    %v2251 = vpack.c.b16 %v1929, %v1922
    %v2252 = vpack.c.b16 %v1930, %v1923
    %v2253 = vpack.c.b16 %v1938, %v1931
    %v2254 = vpack.c.b16 %v1939, %v1932
    %v2255 = vpack.c.b16 %v1940, %v1933
    %v2256 = vpack.c.b16 %v1941, %v1934
    %v2257 = vpack.c.b16 %v1942, %v1935
    %v2258 = vpack.c.b16 %v1943, %v1936
    %v2259 = vpack.c.b16 %v1944, %v1937
    %v2260 = vpack.c.b16 %v1952, %v1945
    %v2261 = vpack.c.b16 %v1953, %v1946
    %v2262 = vpack.c.b16 %v1954, %v1947
    %v2263 = vpack.c.b16 %v1955, %v1948
    %v2264 = vpack.c.b16 %v1956, %v1949
    %v2265 = vpack.c.b16 %v1957, %v1950
    %v2266 = vpack.c.b16 %v1958, %v1951
    %v2267 = vpack.c.b16 %v1966, %v1959
    %v2268 = vpack.c.b16 %v1967, %v1960
    %v2269 = vpack.c.b16 %v1968, %v1961
    %v2270 = vpack.c.b16 %v1969, %v1962
    %v2271 = vpack.c.b16 %v1970, %v1963
    %v2272 = vpack.c.b16 %v1971, %v1964
    %v2273 = vpack.c.b16 %v1972, %v1965
    %v2274 = vpack.c.b16 %v1980, %v1973
    %v2275 = vpack.c.b16 %v1981, %v1974
    %v2276 = vpack.c.b16 %v1982, %v1975
    %v2277 = vpack.c.b16 %v1983, %v1976
    %v2278 = vpack.c.b16 %v1984, %v1977
    %v2279 = vpack.c.b16 %v1985, %v1978
    %v2280 = vpack.c.b16 %v1986, %v1979
    %v2281 = vpack.c.b16 %v1994, %v1987
    %v2282 = vpack.c.b16 %v1995, %v1988
    %v2283 = vpack.c.b16 %v1996, %v1989
    %v2284 = vpack.c.b16 %v1997, %v1990
    %v2285 = vpack.c.b16 %v1998, %v1991
    %v2286 = vpack.c.b16 %v1999, %v1992
    %v2287 = vpack.c.b16 %v2000, %v1993
    %v2288 = vpack.c.b16 %v2008, %v2001
    %v2289 = vpack.c.b16 %v2009, %v2002
    %v2290 = vpack.c.b16 %v2010, %v2003
    %v2291 = vpack.c.b16 %v2011, %v2004
    %v2292 = vpack.c.b16 %v2012, %v2005
    %v2293 = vpack.c.b16 %v2013, %v2006
    %v2294 = vpack.c.b16 %v2014, %v2007
    %v2295 = vpack.c.b16 %v2022, %v2015
    %v2296 = vpack.c.b16 %v2023, %v2016
    %v2297 = vpack.c.b16 %v2024, %v2017
    %v2298 = vpack.c.b16 %v2025, %v2018
    %v2299 = vpack.c.b16 %v2026, %v2019
    %v2300 = vpack.c.b16 %v2027, %v2020
    %v2301 = vpack.c.b16 %v2028, %v2021
    %v2302 = vpack.c.b16 %v2036, %v2029
    %v2303 = vpack.c.b16 %v2037, %v2030
    %v2304 = vpack.c.b16 %v2038, %v2031
    %v2305 = vpack.c.b16 %v2039, %v2032
    %v2306 = vpack.c.b16 %v2040, %v2033
    %v2307 = vpack.c.b16 %v2041, %v2034
    %v2308 = vpack.c.b16 %v2042, %v2035
    %v2309 = vpack.c.b16 %v2050, %v2043
    %v2310 = vpack.c.b16 %v2051, %v2044
    %v2311 = vpack.c.b16 %v2052, %v2045
    %v2312 = vpack.c.b16 %v2053, %v2046
    %v2313 = vpack.c.b16 %v2054, %v2047
    %v2314 = vpack.c.b16 %v2055, %v2048
    %v2315 = vpack.c.b16 %v2056, %v2049
    %v2316 = vpack.c.b16 %v2064, %v2057
    %v2317 = vpack.c.b16 %v2065, %v2058
    %v2318 = vpack.c.b16 %v2066, %v2059
    %v2319 = vpack.c.b16 %v2067, %v2060
    %v2320 = vpack.c.b16 %v2068, %v2061
    %v2321 = vpack.c.b16 %v2069, %v2062
    %v2322 = vpack.c.b16 %v2070, %v2063
    %v2323 = vpack.c.b16 %v2078, %v2071
    %v2324 = vpack.c.b16 %v2079, %v2072
    %v2325 = vpack.c.b16 %v2080, %v2073
    %v2326 = vpack.c.b16 %v2081, %v2074
    %v2327 = vpack.c.b16 %v2082, %v2075
    %v2328 = vpack.c.b16 %v2083, %v2076
    %v2329 = vpack.c.b16 %v2084, %v2077
    %v2330 = vpack.c.b16 %v2092, %v2085
    %v2331 = vpack.c.b16 %v2093, %v2086
    %v2332 = vpack.c.b16 %v2094, %v2087
    %v2333 = vpack.c.b16 %v2095, %v2088
    %v2334 = vpack.c.b16 %v2096, %v2089
    %v2335 = vpack.c.b16 %v2097, %v2090
    %v2336 = vpack.c.b16 %v2098, %v2091
    %v2337 = vpack.c.b16 %v2106, %v2099
    %v2338 = vpack.c.b16 %v2107, %v2100
    %v2339 = vpack.c.b16 %v2108, %v2101
    %v2340 = vpack.c.b16 %v2109, %v2102
    %v2341 = vpack.c.b16 %v2110, %v2103
    %v2342 = vpack.c.b16 %v2111, %v2104
    %v2343 = vpack.c.b16 %v2112, %v2105
    %v2344 = vpack.c.b16 %v2120, %v2113
    %v2345 = vpack.c.b16 %v2121, %v2114
    %v2346 = vpack.c.b16 %v2122, %v2115
    %v2347 = vpack.c.b16 %v2123, %v2116
    %v2348 = vpack.c.b16 %v2124, %v2117
    %v2349 = vpack.c.b16 %v2125, %v2118
    %v2350 = vpack.c.b16 %v2126, %v2119
    %2575 = vmatpush.bf16.msra.mxu0 %v2176
    %2576 = vmatpush.bf16.msra.mxu0 %v2169
    %2577 = vmatpush.bf16.msra.mxu0 %v2162
    %2578 = vmatpush.bf16.msra.mxu0 %v2155
    %2579 = vmatpush.bf16.msra.mxu0 %v2148
    %2580 = vmatpush.bf16.msra.mxu0 %v2141
    %2581 = vmatpush.bf16.msra.mxu0 %v2134
    %2582 = vmatpush.bf16.msra.mxu0 %v2127
    %2583 = vmatmul.bf16.gmra.mxu0 %v1419
    %v2584 = vpop.f32.mrf.mxu0
    %v2585 = vadd.f32 0.0, %v2584
    %v2586 = vpop.f32.mrf.mxu0
    %2587 = vdwg.mxu0
    %2588 = vmatpush.bf16.msra.mxu0 %v2232
    %2589 = vmatpush.bf16.msra.mxu0 %v2225
    %2590 = vmatpush.bf16.msra.mxu0 %v2218
    %2591 = vmatpush.bf16.msra.mxu0 %v2211
    %2592 = vmatpush.bf16.msra.mxu0 %v2204
    %2593 = vmatpush.bf16.msra.mxu0 %v2197
    %2594 = vmatpush.bf16.msra.mxu0 %v2190
    %2595 = vmatpush.bf16.msra.mxu0 %v2183
    %2596 = vmatmul.bf16.gmra.mxu0 %v1420
    %v2597 = vpop.f32.mrf.mxu0
    %v2598 = vadd.f32 %v2585, %v2597
    %v2599 = vpop.f32.mrf.mxu0
    %2600 = vdwg.mxu0
    %2601 = vmatpush.bf16.msra.mxu0 %v2288
    %2602 = vmatpush.bf16.msra.mxu0 %v2281
    %2603 = vmatpush.bf16.msra.mxu0 %v2274
    %2604 = vmatpush.bf16.msra.mxu0 %v2267
    %2605 = vmatpush.bf16.msra.mxu0 %v2260
    %2606 = vmatpush.bf16.msra.mxu0 %v2253
    %2607 = vmatpush.bf16.msra.mxu0 %v2246
    %2608 = vmatpush.bf16.msra.mxu0 %v2239
    %2609 = vmatmul.bf16.gmra.mxu0 %v1421
    %v2610 = vpop.f32.mrf.mxu0
    %v2611 = vadd.f32 %v2598, %v2610
    %v2612 = vpop.f32.mrf.mxu0
    %2613 = vdwg.mxu0
    %2614 = vmatpush.bf16.msra.mxu0 %v2344
    %2615 = vmatpush.bf16.msra.mxu0 %v2337
    %2616 = vmatpush.bf16.msra.mxu0 %v2330
    %2617 = vmatpush.bf16.msra.mxu0 %v2323
    %2618 = vmatpush.bf16.msra.mxu0 %v2316
    %2619 = vmatpush.bf16.msra.mxu0 %v2309
    %2620 = vmatpush.bf16.msra.mxu0 %v2302
    %2621 = vmatpush.bf16.msra.mxu0 %v2295
    %2622 = vmatmul.bf16.gmra.mxu0 %v1422
    %v2623 = vpop.f32.mrf.mxu0
    %v2624 = vadd.f32 %v2611, %v2623
    %v2625 = vpop.f32.mrf.mxu0
    %2626 = vdwg.mxu0
    %2627 = vmatpush.bf16.msra.mxu0 %v2177
    %2628 = vmatpush.bf16.msra.mxu0 %v2170
    %2629 = vmatpush.bf16.msra.mxu0 %v2163
    %2630 = vmatpush.bf16.msra.mxu0 %v2156
    %2631 = vmatpush.bf16.msra.mxu0 %v2149
    %2632 = vmatpush.bf16.msra.mxu0 %v2142
    %2633 = vmatpush.bf16.msra.mxu0 %v2135
    %2634 = vmatpush.bf16.msra.mxu0 %v2128
    %2635 = vmatmul.bf16.gmra.mxu0 %v1419
    %v2636 = vpop.f32.mrf.mxu0
    %v2637 = vadd.f32 0.0, %v2636
    %v2638 = vpop.f32.mrf.mxu0
    %2639 = vdwg.mxu0
    %2640 = vmatpush.bf16.msra.mxu0 %v2233
    %2641 = vmatpush.bf16.msra.mxu0 %v2226
    %2642 = vmatpush.bf16.msra.mxu0 %v2219
    %2643 = vmatpush.bf16.msra.mxu0 %v2212
    %2644 = vmatpush.bf16.msra.mxu0 %v2205
    %2645 = vmatpush.bf16.msra.mxu0 %v2198
    %2646 = vmatpush.bf16.msra.mxu0 %v2191
    %2647 = vmatpush.bf16.msra.mxu0 %v2184
    %2648 = vmatmul.bf16.gmra.mxu0 %v1420
    %v2649 = vpop.f32.mrf.mxu0
    %v2650 = vadd.f32 %v2637, %v2649
    %v2651 = vpop.f32.mrf.mxu0
    %2652 = vdwg.mxu0
    %2653 = vmatpush.bf16.msra.mxu0 %v2289
    %2654 = vmatpush.bf16.msra.mxu0 %v2282
    %2655 = vmatpush.bf16.msra.mxu0 %v2275
    %2656 = vmatpush.bf16.msra.mxu0 %v2268
    %2657 = vmatpush.bf16.msra.mxu0 %v2261
    %2658 = vmatpush.bf16.msra.mxu0 %v2254
    %2659 = vmatpush.bf16.msra.mxu0 %v2247
    %2660 = vmatpush.bf16.msra.mxu0 %v2240
    %2661 = vmatmul.bf16.gmra.mxu0 %v1421
    %v2662 = vpop.f32.mrf.mxu0
    %v2663 = vadd.f32 %v2650, %v2662
    %v2664 = vpop.f32.mrf.mxu0
    %2665 = vdwg.mxu0
    %2666 = vmatpush.bf16.msra.mxu0 %v2345
    %2667 = vmatpush.bf16.msra.mxu0 %v2338
    %2668 = vmatpush.bf16.msra.mxu0 %v2331
    %2669 = vmatpush.bf16.msra.mxu0 %v2324
    %2670 = vmatpush.bf16.msra.mxu0 %v2317
    %2671 = vmatpush.bf16.msra.mxu0 %v2310
    %2672 = vmatpush.bf16.msra.mxu0 %v2303
    %2673 = vmatpush.bf16.msra.mxu0 %v2296
    %2674 = vmatmul.bf16.gmra.mxu0 %v1422
    %v2675 = vpop.f32.mrf.mxu0
    %v2676 = vadd.f32 %v2663, %v2675
    %v2677 = vpop.f32.mrf.mxu0
    %2678 = vdwg.mxu0
    %2679 = vmatpush.bf16.msra.mxu0 %v2178
    %2680 = vmatpush.bf16.msra.mxu0 %v2171
    %2681 = vmatpush.bf16.msra.mxu0 %v2164
    %2682 = vmatpush.bf16.msra.mxu0 %v2157
    %2683 = vmatpush.bf16.msra.mxu0 %v2150
    %2684 = vmatpush.bf16.msra.mxu0 %v2143
    %2685 = vmatpush.bf16.msra.mxu0 %v2136
    %2686 = vmatpush.bf16.msra.mxu0 %v2129
    %2687 = vmatmul.bf16.gmra.mxu0 %v1419
    %v2688 = vpop.f32.mrf.mxu0
    %v2689 = vadd.f32 0.0, %v2688
    %v2690 = vpop.f32.mrf.mxu0
    %2691 = vdwg.mxu0
    %2692 = vmatpush.bf16.msra.mxu0 %v2234
    %2693 = vmatpush.bf16.msra.mxu0 %v2227
    %2694 = vmatpush.bf16.msra.mxu0 %v2220
    %2695 = vmatpush.bf16.msra.mxu0 %v2213
    %2696 = vmatpush.bf16.msra.mxu0 %v2206
    %2697 = vmatpush.bf16.msra.mxu0 %v2199
    %2698 = vmatpush.bf16.msra.mxu0 %v2192
    %2699 = vmatpush.bf16.msra.mxu0 %v2185
    %2700 = vmatmul.bf16.gmra.mxu0 %v1420
    %v2701 = vpop.f32.mrf.mxu0
    %v2702 = vadd.f32 %v2689, %v2701
    %v2703 = vpop.f32.mrf.mxu0
    %2704 = vdwg.mxu0
    %2705 = vmatpush.bf16.msra.mxu0 %v2290
    %2706 = vmatpush.bf16.msra.mxu0 %v2283
    %2707 = vmatpush.bf16.msra.mxu0 %v2276
    %2708 = vmatpush.bf16.msra.mxu0 %v2269
    %2709 = vmatpush.bf16.msra.mxu0 %v2262
    %2710 = vmatpush.bf16.msra.mxu0 %v2255
    %2711 = vmatpush.bf16.msra.mxu0 %v2248
    %2712 = vmatpush.bf16.msra.mxu0 %v2241
    %2713 = vmatmul.bf16.gmra.mxu0 %v1421
    %v2714 = vpop.f32.mrf.mxu0
    %v2715 = vadd.f32 %v2702, %v2714
    %v2716 = vpop.f32.mrf.mxu0
    %2717 = vdwg.mxu0
    %2718 = vmatpush.bf16.msra.mxu0 %v2346
    %2719 = vmatpush.bf16.msra.mxu0 %v2339
    %2720 = vmatpush.bf16.msra.mxu0 %v2332
    %2721 = vmatpush.bf16.msra.mxu0 %v2325
    %2722 = vmatpush.bf16.msra.mxu0 %v2318
    %2723 = vmatpush.bf16.msra.mxu0 %v2311
    %2724 = vmatpush.bf16.msra.mxu0 %v2304
    %2725 = vmatpush.bf16.msra.mxu0 %v2297
    %2726 = vmatmul.bf16.gmra.mxu0 %v1422
    %v2727 = vpop.f32.mrf.mxu0
    %v2728 = vadd.f32 %v2715, %v2727
    %v2729 = vpop.f32.mrf.mxu0
    %2730 = vdwg.mxu0
    %2731 = vmatpush.bf16.msra.mxu0 %v2179
    %2732 = vmatpush.bf16.msra.mxu0 %v2172
    %2733 = vmatpush.bf16.msra.mxu0 %v2165
    %2734 = vmatpush.bf16.msra.mxu0 %v2158
    %2735 = vmatpush.bf16.msra.mxu0 %v2151
    %2736 = vmatpush.bf16.msra.mxu0 %v2144
    %2737 = vmatpush.bf16.msra.mxu0 %v2137
    %2738 = vmatpush.bf16.msra.mxu0 %v2130
    %2739 = vmatmul.bf16.gmra.mxu0 %v1419
    %v2740 = vpop.f32.mrf.mxu0
    %v2741 = vadd.f32 0.0, %v2740
    %v2742 = vpop.f32.mrf.mxu0
    %2743 = vdwg.mxu0
    %2744 = vmatpush.bf16.msra.mxu0 %v2235
    %2745 = vmatpush.bf16.msra.mxu0 %v2228
    %2746 = vmatpush.bf16.msra.mxu0 %v2221
    %2747 = vmatpush.bf16.msra.mxu0 %v2214
    %2748 = vmatpush.bf16.msra.mxu0 %v2207
    %2749 = vmatpush.bf16.msra.mxu0 %v2200
    %2750 = vmatpush.bf16.msra.mxu0 %v2193
    %2751 = vmatpush.bf16.msra.mxu0 %v2186
    %2752 = vmatmul.bf16.gmra.mxu0 %v1420
    %v2753 = vpop.f32.mrf.mxu0
    %v2754 = vadd.f32 %v2741, %v2753
    %v2755 = vpop.f32.mrf.mxu0
    %2756 = vdwg.mxu0
    %2757 = vmatpush.bf16.msra.mxu0 %v2291
    %2758 = vmatpush.bf16.msra.mxu0 %v2284
    %2759 = vmatpush.bf16.msra.mxu0 %v2277
    %2760 = vmatpush.bf16.msra.mxu0 %v2270
    %2761 = vmatpush.bf16.msra.mxu0 %v2263
    %2762 = vmatpush.bf16.msra.mxu0 %v2256
    %2763 = vmatpush.bf16.msra.mxu0 %v2249
    %2764 = vmatpush.bf16.msra.mxu0 %v2242
    %2765 = vmatmul.bf16.gmra.mxu0 %v1421
    %v2766 = vpop.f32.mrf.mxu0
    %v2767 = vadd.f32 %v2754, %v2766
    %v2768 = vpop.f32.mrf.mxu0
    %2769 = vdwg.mxu0
    %2770 = vmatpush.bf16.msra.mxu0 %v2347
    %2771 = vmatpush.bf16.msra.mxu0 %v2340
    %2772 = vmatpush.bf16.msra.mxu0 %v2333
    %2773 = vmatpush.bf16.msra.mxu0 %v2326
    %2774 = vmatpush.bf16.msra.mxu0 %v2319
    %2775 = vmatpush.bf16.msra.mxu0 %v2312
    %2776 = vmatpush.bf16.msra.mxu0 %v2305
    %2777 = vmatpush.bf16.msra.mxu0 %v2298
    %2778 = vmatmul.bf16.gmra.mxu0 %v1422
    %v2779 = vpop.f32.mrf.mxu0
    %v2780 = vadd.f32 %v2767, %v2779
    %v2781 = vpop.f32.mrf.mxu0
    %2782 = vdwg.mxu0
    %2783 = vmatpush.bf16.msra.mxu0 %v2180
    %2784 = vmatpush.bf16.msra.mxu0 %v2173
    %2785 = vmatpush.bf16.msra.mxu0 %v2166
    %2786 = vmatpush.bf16.msra.mxu0 %v2159
    %2787 = vmatpush.bf16.msra.mxu0 %v2152
    %2788 = vmatpush.bf16.msra.mxu0 %v2145
    %2789 = vmatpush.bf16.msra.mxu0 %v2138
    %2790 = vmatpush.bf16.msra.mxu0 %v2131
    %2791 = vmatmul.bf16.gmra.mxu0 %v1419
    %v2792 = vpop.f32.mrf.mxu0
    %v2793 = vadd.f32 0.0, %v2792
    %v2794 = vpop.f32.mrf.mxu0
    %2795 = vdwg.mxu0
    %2796 = vmatpush.bf16.msra.mxu0 %v2236
    %2797 = vmatpush.bf16.msra.mxu0 %v2229
    %2798 = vmatpush.bf16.msra.mxu0 %v2222
    %2799 = vmatpush.bf16.msra.mxu0 %v2215
    %2800 = vmatpush.bf16.msra.mxu0 %v2208
    %2801 = vmatpush.bf16.msra.mxu0 %v2201
    %2802 = vmatpush.bf16.msra.mxu0 %v2194
    %2803 = vmatpush.bf16.msra.mxu0 %v2187
    %2804 = vmatmul.bf16.gmra.mxu0 %v1420
    %v2805 = vpop.f32.mrf.mxu0
    %v2806 = vadd.f32 %v2793, %v2805
    %v2807 = vpop.f32.mrf.mxu0
    %2808 = vdwg.mxu0
    %2809 = vmatpush.bf16.msra.mxu0 %v2292
    %2810 = vmatpush.bf16.msra.mxu0 %v2285
    %2811 = vmatpush.bf16.msra.mxu0 %v2278
    %2812 = vmatpush.bf16.msra.mxu0 %v2271
    %2813 = vmatpush.bf16.msra.mxu0 %v2264
    %2814 = vmatpush.bf16.msra.mxu0 %v2257
    %2815 = vmatpush.bf16.msra.mxu0 %v2250
    %2816 = vmatpush.bf16.msra.mxu0 %v2243
    %2817 = vmatmul.bf16.gmra.mxu0 %v1421
    %v2818 = vpop.f32.mrf.mxu0
    %v2819 = vadd.f32 %v2806, %v2818
    %v2820 = vpop.f32.mrf.mxu0
    %2821 = vdwg.mxu0
    %2822 = vmatpush.bf16.msra.mxu0 %v2348
    %2823 = vmatpush.bf16.msra.mxu0 %v2341
    %2824 = vmatpush.bf16.msra.mxu0 %v2334
    %2825 = vmatpush.bf16.msra.mxu0 %v2327
    %2826 = vmatpush.bf16.msra.mxu0 %v2320
    %2827 = vmatpush.bf16.msra.mxu0 %v2313
    %2828 = vmatpush.bf16.msra.mxu0 %v2306
    %2829 = vmatpush.bf16.msra.mxu0 %v2299
    %2830 = vmatmul.bf16.gmra.mxu0 %v1422
    %v2831 = vpop.f32.mrf.mxu0
    %v2832 = vadd.f32 %v2819, %v2831
    %v2833 = vpop.f32.mrf.mxu0
    %2834 = vdwg.mxu0
    %2835 = vmatpush.bf16.msra.mxu0 %v2181
    %2836 = vmatpush.bf16.msra.mxu0 %v2174
    %2837 = vmatpush.bf16.msra.mxu0 %v2167
    %2838 = vmatpush.bf16.msra.mxu0 %v2160
    %2839 = vmatpush.bf16.msra.mxu0 %v2153
    %2840 = vmatpush.bf16.msra.mxu0 %v2146
    %2841 = vmatpush.bf16.msra.mxu0 %v2139
    %2842 = vmatpush.bf16.msra.mxu0 %v2132
    %2843 = vmatmul.bf16.gmra.mxu0 %v1419
    %v2844 = vpop.f32.mrf.mxu0
    %v2845 = vadd.f32 0.0, %v2844
    %v2846 = vpop.f32.mrf.mxu0
    %2847 = vdwg.mxu0
    %2848 = vmatpush.bf16.msra.mxu0 %v2237
    %2849 = vmatpush.bf16.msra.mxu0 %v2230
    %2850 = vmatpush.bf16.msra.mxu0 %v2223
    %2851 = vmatpush.bf16.msra.mxu0 %v2216
    %2852 = vmatpush.bf16.msra.mxu0 %v2209
    %2853 = vmatpush.bf16.msra.mxu0 %v2202
    %2854 = vmatpush.bf16.msra.mxu0 %v2195
    %2855 = vmatpush.bf16.msra.mxu0 %v2188
    %2856 = vmatmul.bf16.gmra.mxu0 %v1420
    %v2857 = vpop.f32.mrf.mxu0
    %v2858 = vadd.f32 %v2845, %v2857
    %v2859 = vpop.f32.mrf.mxu0
    %2860 = vdwg.mxu0
    %2861 = vmatpush.bf16.msra.mxu0 %v2293
    %2862 = vmatpush.bf16.msra.mxu0 %v2286
    %2863 = vmatpush.bf16.msra.mxu0 %v2279
    %2864 = vmatpush.bf16.msra.mxu0 %v2272
    %2865 = vmatpush.bf16.msra.mxu0 %v2265
    %2866 = vmatpush.bf16.msra.mxu0 %v2258
    %2867 = vmatpush.bf16.msra.mxu0 %v2251
    %2868 = vmatpush.bf16.msra.mxu0 %v2244
    %2869 = vmatmul.bf16.gmra.mxu0 %v1421
    %v2870 = vpop.f32.mrf.mxu0
    %v2871 = vadd.f32 %v2858, %v2870
    %v2872 = vpop.f32.mrf.mxu0
    %2873 = vdwg.mxu0
    %2874 = vmatpush.bf16.msra.mxu0 %v2349
    %2875 = vmatpush.bf16.msra.mxu0 %v2342
    %2876 = vmatpush.bf16.msra.mxu0 %v2335
    %2877 = vmatpush.bf16.msra.mxu0 %v2328
    %2878 = vmatpush.bf16.msra.mxu0 %v2321
    %2879 = vmatpush.bf16.msra.mxu0 %v2314
    %2880 = vmatpush.bf16.msra.mxu0 %v2307
    %2881 = vmatpush.bf16.msra.mxu0 %v2300
    %2882 = vmatmul.bf16.gmra.mxu0 %v1422
    %v2883 = vpop.f32.mrf.mxu0
    %v2884 = vadd.f32 %v2871, %v2883
    %v2885 = vpop.f32.mrf.mxu0
    %2886 = vdwg.mxu0
    %2887 = vmatpush.bf16.msra.mxu0 %v2182
    %2888 = vmatpush.bf16.msra.mxu0 %v2175
    %2889 = vmatpush.bf16.msra.mxu0 %v2168
    %2890 = vmatpush.bf16.msra.mxu0 %v2161
    %2891 = vmatpush.bf16.msra.mxu0 %v2154
    %2892 = vmatpush.bf16.msra.mxu0 %v2147
    %2893 = vmatpush.bf16.msra.mxu0 %v2140
    %2894 = vmatpush.bf16.msra.mxu0 %v2133
    %2895 = vmatmul.bf16.gmra.mxu0 %v1419
    %v2896 = vpop.f32.mrf.mxu0
    %v2897 = vadd.f32 0.0, %v2896
    %v2898 = vpop.f32.mrf.mxu0
    %2899 = vdwg.mxu0
    %2900 = vmatpush.bf16.msra.mxu0 %v2238
    %2901 = vmatpush.bf16.msra.mxu0 %v2231
    %2902 = vmatpush.bf16.msra.mxu0 %v2224
    %2903 = vmatpush.bf16.msra.mxu0 %v2217
    %2904 = vmatpush.bf16.msra.mxu0 %v2210
    %2905 = vmatpush.bf16.msra.mxu0 %v2203
    %2906 = vmatpush.bf16.msra.mxu0 %v2196
    %2907 = vmatpush.bf16.msra.mxu0 %v2189
    %2908 = vmatmul.bf16.gmra.mxu0 %v1420
    %v2909 = vpop.f32.mrf.mxu0
    %v2910 = vadd.f32 %v2897, %v2909
    %v2911 = vpop.f32.mrf.mxu0
    %2912 = vdwg.mxu0
    %2913 = vmatpush.bf16.msra.mxu0 %v2294
    %2914 = vmatpush.bf16.msra.mxu0 %v2287
    %2915 = vmatpush.bf16.msra.mxu0 %v2280
    %2916 = vmatpush.bf16.msra.mxu0 %v2273
    %2917 = vmatpush.bf16.msra.mxu0 %v2266
    %2918 = vmatpush.bf16.msra.mxu0 %v2259
    %2919 = vmatpush.bf16.msra.mxu0 %v2252
    %2920 = vmatpush.bf16.msra.mxu0 %v2245
    %2921 = vmatmul.bf16.gmra.mxu0 %v1421
    %v2922 = vpop.f32.mrf.mxu0
    %v2923 = vadd.f32 %v2910, %v2922
    %v2924 = vpop.f32.mrf.mxu0
    %2925 = vdwg.mxu0
    %2926 = vmatpush.bf16.msra.mxu0 %v2350
    %2927 = vmatpush.bf16.msra.mxu0 %v2343
    %2928 = vmatpush.bf16.msra.mxu0 %v2336
    %2929 = vmatpush.bf16.msra.mxu0 %v2329
    %2930 = vmatpush.bf16.msra.mxu0 %v2322
    %2931 = vmatpush.bf16.msra.mxu0 %v2315
    %2932 = vmatpush.bf16.msra.mxu0 %v2308
    %2933 = vmatpush.bf16.msra.mxu0 %v2301
    %2934 = vmatmul.bf16.gmra.mxu0 %v1422
    %v2935 = vpop.f32.mrf.mxu0
    %v2936 = vadd.f32 %v2923, %v2935
    %v2937 = vpop.f32.mrf.mxu0
    %2938 = vdwg.mxu0
    %v2939 = vrot.slane %v2624, 4
    %v2940 = vadd.f32 %v2624, %v2939
    %v2941 = vrot.slane %v2940, 2
    %v2942 = vadd.f32 %v2940, %v2941
    %v2943 = vrot.slane %v2942, 1
    %v2944 = vadd.f32 %v2942, %v2943
    %v2945 = vrot.slane %v2676, 4
    %v2946 = vadd.f32 %v2676, %v2945
    %v2947 = vrot.slane %v2946, 2
    %v2948 = vadd.f32 %v2946, %v2947
    %v2949 = vrot.slane %v2948, 1
    %v2950 = vadd.f32 %v2948, %v2949
    %v2951 = vrot.slane %v2728, 4
    %v2952 = vadd.f32 %v2728, %v2951
    %v2953 = vrot.slane %v2952, 2
    %v2954 = vadd.f32 %v2952, %v2953
    %v2955 = vrot.slane %v2954, 1
    %v2956 = vadd.f32 %v2954, %v2955
    %v2957 = vrot.slane %v2780, 4
    %v2958 = vadd.f32 %v2780, %v2957
    %v2959 = vrot.slane %v2958, 2
    %v2960 = vadd.f32 %v2958, %v2959
    %v2961 = vrot.slane %v2960, 1
    %v2962 = vadd.f32 %v2960, %v2961
    %v2963 = vrot.slane %v2832, 4
    %v2964 = vadd.f32 %v2832, %v2963
    %v2965 = vrot.slane %v2964, 2
    %v2966 = vadd.f32 %v2964, %v2965
    %v2967 = vrot.slane %v2966, 1
    %v2968 = vadd.f32 %v2966, %v2967
    %v2969 = vrot.slane %v2884, 4
    %v2970 = vadd.f32 %v2884, %v2969
    %v2971 = vrot.slane %v2970, 2
    %v2972 = vadd.f32 %v2970, %v2971
    %v2973 = vrot.slane %v2972, 1
    %v2974 = vadd.f32 %v2972, %v2973
    %v2975 = vrot.slane %v2936, 4
    %v2976 = vadd.f32 %v2936, %v2975
    %v2977 = vrot.slane %v2976, 2
    %v2978 = vadd.f32 %v2976, %v2977
    %v2979 = vrot.slane %v2978, 1
    %v2980 = vadd.f32 %v2978, %v2979
    %v2981 = vmul.f32 %v2944, 0.125
    %v2982 = vmul.f32 %v2950, 0.125
    %v2983 = vmul.f32 %v2956, 0.125
    %v2984 = vmul.f32 %v2962, 0.125
    %v2985 = vmul.f32 %v2968, 0.125
    %v2986 = vmul.f32 %v2974, 0.125
    %v2987 = vmul.f32 %v2980, 0.125
    %v2988 = vsub.f32 %v2624, %v2981
    %v2989 = vsub.f32 %v2676, %v2982
    %v2990 = vsub.f32 %v2728, %v2983
    %v2991 = vsub.f32 %v2780, %v2984
    %v2992 = vsub.f32 %v2832, %v2985
    %v2993 = vsub.f32 %v2884, %v2986
    %v2994 = vsub.f32 %v2936, %v2987
    %v2995 = vmul.f32 %v2988, %v2988
    %v2996 = vmul.f32 %v2989, %v2989
    %v2997 = vmul.f32 %v2990, %v2990
    %v2998 = vmul.f32 %v2991, %v2991
    %v2999 = vmul.f32 %v2992, %v2992
    %v3000 = vmul.f32 %v2993, %v2993
    %v3001 = vmul.f32 %v2994, %v2994
    %v3002 = vrot.slane %v2995, 4
    %v3003 = vadd.f32 %v2995, %v3002
    %v3004 = vrot.slane %v3003, 2
    %v3005 = vadd.f32 %v3003, %v3004
    %v3006 = vrot.slane %v3005, 1
    %v3007 = vadd.f32 %v3005, %v3006
    %v3008 = vrot.slane %v2996, 4
    %v3009 = vadd.f32 %v2996, %v3008
    %v3010 = vrot.slane %v3009, 2
    %v3011 = vadd.f32 %v3009, %v3010
    %v3012 = vrot.slane %v3011, 1
    %v3013 = vadd.f32 %v3011, %v3012
    %v3014 = vrot.slane %v2997, 4
    %v3015 = vadd.f32 %v2997, %v3014
    %v3016 = vrot.slane %v3015, 2
    %v3017 = vadd.f32 %v3015, %v3016
    %v3018 = vrot.slane %v3017, 1
    %v3019 = vadd.f32 %v3017, %v3018
    %v3020 = vrot.slane %v2998, 4
    %v3021 = vadd.f32 %v2998, %v3020
    %v3022 = vrot.slane %v3021, 2
    %v3023 = vadd.f32 %v3021, %v3022
    %v3024 = vrot.slane %v3023, 1
    %v3025 = vadd.f32 %v3023, %v3024
    %v3026 = vrot.slane %v2999, 4
    %v3027 = vadd.f32 %v2999, %v3026
    %v3028 = vrot.slane %v3027, 2
    %v3029 = vadd.f32 %v3027, %v3028
    %v3030 = vrot.slane %v3029, 1
    %v3031 = vadd.f32 %v3029, %v3030
    %v3032 = vrot.slane %v3000, 4
    %v3033 = vadd.f32 %v3000, %v3032
    %v3034 = vrot.slane %v3033, 2
    %v3035 = vadd.f32 %v3033, %v3034
    %v3036 = vrot.slane %v3035, 1
    %v3037 = vadd.f32 %v3035, %v3036
    %v3038 = vrot.slane %v3001, 4
    %v3039 = vadd.f32 %v3001, %v3038
    %v3040 = vrot.slane %v3039, 2
    %v3041 = vadd.f32 %v3039, %v3040
    %v3042 = vrot.slane %v3041, 1
    %v3043 = vadd.f32 %v3041, %v3042
    %v3044 = vmul.f32 %v3007, 0.125
    %v3045 = vmul.f32 %v3013, 0.125
    %v3046 = vmul.f32 %v3019, 0.125
    %v3047 = vmul.f32 %v3025, 0.125
    %v3048 = vmul.f32 %v3031, 0.125
    %v3049 = vmul.f32 %v3037, 0.125
    %v3050 = vmul.f32 %v3043, 0.125
    %v3051 = vadd.f32 %v3044, 1e-05
    %v3052 = vadd.f32 %v3045, 1e-05
    %v3053 = vadd.f32 %v3046, 1e-05
    %v3054 = vadd.f32 %v3047, 1e-05
    %v3055 = vadd.f32 %v3048, 1e-05
    %v3056 = vadd.f32 %v3049, 1e-05
    %v3057 = vadd.f32 %v3050, 1e-05
    %v3058 = vrsqrt.pop %v3051
    %v3059 = vmul.f32 %v3058, %v3051
    %v3060 = vmul.f32 %v3059, %v3058
    %v3061 = vmul.f32 0.5, %v3060
    %v3062 = vsub.f32 1.5, %v3061
    %v3063 = vmul.f32 %v3058, %v3062
    %vm3064 = vweird.f32 %v3051
    %vm3065 = vweird.f32 %v3058
    %vm3066 = vmor %vm3064, %vm3065
    %v3067 = vsel %vm3066, %v3058, %v3063
    %v3068 = vrsqrt.pop %v3052
    %v3069 = vmul.f32 %v3068, %v3052
    %v3070 = vmul.f32 %v3069, %v3068
    %v3071 = vmul.f32 0.5, %v3070
    %v3072 = vsub.f32 1.5, %v3071
    %v3073 = vmul.f32 %v3068, %v3072
    %vm3074 = vweird.f32 %v3052
    %vm3075 = vweird.f32 %v3068
    %vm3076 = vmor %vm3074, %vm3075
    %v3077 = vsel %vm3076, %v3068, %v3073
    %v3078 = vrsqrt.pop %v3053
    %v3079 = vmul.f32 %v3078, %v3053
    %v3080 = vmul.f32 %v3079, %v3078
    %v3081 = vmul.f32 0.5, %v3080
    %v3082 = vsub.f32 1.5, %v3081
    %v3083 = vmul.f32 %v3078, %v3082
    %vm3084 = vweird.f32 %v3053
    %vm3085 = vweird.f32 %v3078
    %vm3086 = vmor %vm3084, %vm3085
    %v3087 = vsel %vm3086, %v3078, %v3083
    %v3088 = vrsqrt.pop %v3054
    %v3089 = vmul.f32 %v3088, %v3054
    %v3090 = vmul.f32 %v3089, %v3088
    %v3091 = vmul.f32 0.5, %v3090
    %v3092 = vsub.f32 1.5, %v3091
    %v3093 = vmul.f32 %v3088, %v3092
    %vm3094 = vweird.f32 %v3054
    %vm3095 = vweird.f32 %v3088
    %vm3096 = vmor %vm3094, %vm3095
    %v3097 = vsel %vm3096, %v3088, %v3093
    %v3098 = vrsqrt.pop %v3055
    %v3099 = vmul.f32 %v3098, %v3055
    %v3100 = vmul.f32 %v3099, %v3098
    %v3101 = vmul.f32 0.5, %v3100
    %v3102 = vsub.f32 1.5, %v3101
    %v3103 = vmul.f32 %v3098, %v3102
    %vm3104 = vweird.f32 %v3055
    %vm3105 = vweird.f32 %v3098
    %vm3106 = vmor %vm3104, %vm3105
    %v3107 = vsel %vm3106, %v3098, %v3103
    %v3108 = vrsqrt.pop %v3056
    %v3109 = vmul.f32 %v3108, %v3056
    %v3110 = vmul.f32 %v3109, %v3108
    %v3111 = vmul.f32 0.5, %v3110
    %v3112 = vsub.f32 1.5, %v3111
    %v3113 = vmul.f32 %v3108, %v3112
    %vm3114 = vweird.f32 %v3056
    %vm3115 = vweird.f32 %v3108
    %vm3116 = vmor %vm3114, %vm3115
    %v3117 = vsel %vm3116, %v3108, %v3113
    %v3118 = vrsqrt.pop %v3057
    %v3119 = vmul.f32 %v3118, %v3057
    %v3120 = vmul.f32 %v3119, %v3118
    %v3121 = vmul.f32 0.5, %v3120
    %v3122 = vsub.f32 1.5, %v3121
    %v3123 = vmul.f32 %v3118, %v3122
    %vm3124 = vweird.f32 %v3057
    %vm3125 = vweird.f32 %v3118
    %vm3126 = vmor %vm3124, %vm3125
    %v3127 = vsel %vm3126, %v3118, %v3123
    %v3135 = vrot.slane %v3077, 7
    %v3136 = vrot.slane %v3087, 6
    %v3137 = vrot.slane %v3097, 5
    %v3138 = vrot.slane %v3107, 4
    %v3139 = vrot.slane %v3117, 3
    %v3140 = vrot.slane %v3127, 2
    %v3141 = vsel %vm475, %v3067, %v3135
    %v3142 = vsel %vm1111, %v3136, %v3137
    %v3143 = vsel %vm1113, %v3141, %v3142
    %vm3144 = vcmask 1044484
    %v3145 = vsel %vm3144, %v3138, %v3139
    %vm3146 = vcmask 1045508
    %v3147 = vsel %vm3146, %v3145, %v3140
    %vm3148 = vcmask 1043456
    %v3149 = vsel %vm3148, %v3143, %v3147
    %v3151 = vmul.f32 %v1158, %v3149
    %v3153 = vperm.slane %v3151, 0
    %v3154 = vperm.slane %v3151, 1
    %v3155 = vperm.slane %v3151, 2
    %v3156 = vperm.slane %v3151, 3
    %v3157 = vperm.slane %v3151, 4
    %v3158 = vperm.slane %v3151, 5
    %v3159 = vperm.slane %v3151, 6
    %v3167 = vmul.f32 %v2988, %v3153
    %v3168 = vmul.f32 %v2989, %v3154
    %v3169 = vmul.f32 %v2990, %v3155
    %v3170 = vmul.f32 %v2991, %v3156
    %v3171 = vmul.f32 %v2992, %v3157
    %v3172 = vmul.f32 %v2993, %v3158
    %v3173 = vmul.f32 %v2994, %v3159
    %v3175 = vperm.slane %v1162, 0
    %v3176 = vperm.slane %v1162, 1
    %v3177 = vperm.slane %v1162, 2
    %v3178 = vperm.slane %v1162, 3
    %v3179 = vperm.slane %v1162, 4
    %v3180 = vperm.slane %v1162, 5
    %v3181 = vperm.slane %v1162, 6
    %v3189 = vadd.f32 %v3167, %v3175
    %v3190 = vadd.f32 %v3168, %v3176
    %v3191 = vadd.f32 %v3169, %v3177
    %v3192 = vadd.f32 %v3170, %v3178
    %v3193 = vadd.f32 %v3171, %v3179
    %v3194 = vadd.f32 %v3172, %v3180
    %v3195 = vadd.f32 %v3173, %v3181
    %v3196 = vmul.f32 %v3189, 0.01
    %v3197 = vmul.f32 %v3190, 0.01
    %v3198 = vmul.f32 %v3191, 0.01
    %v3199 = vmul.f32 %v3192, 0.01
    %v3200 = vmul.f32 %v3193, 0.01
    %v3201 = vmul.f32 %v3194, 0.01
    %v3202 = vmul.f32 %v3195, 0.01
    %v3203 = vmax.f32 %v3189, %v3196
    %v3204 = vmax.f32 %v3190, %v3197
    %v3205 = vmax.f32 %v3191, %v3198
    %v3206 = vmax.f32 %v3192, %v3199
    %v3207 = vmax.f32 %v3193, %v3200
    %v3208 = vmax.f32 %v3194, %v3201
    %v3209 = vmax.f32 %v3195, %v3202
    %3210 = vst [vmem:[#allocation12] sm:$0xff] %v3203
    %3211 = vst [vmem:[#allocation12 + $0x8] sm:$0xff] %v3204
    %3212 = vst [vmem:[#allocation12 + $0x10] sm:$0xff] %v3205
    %3213 = vst [vmem:[#allocation12 + $0x18] sm:$0xff] %v3206
    %3214 = vst [vmem:[#allocation12 + $0x20] sm:$0xff] %v3207
    %3215 = vst [vmem:[#allocation12 + $0x28] sm:$0xff] %v3208
    %3216 = vst [vmem:[#allocation12 + $0x30] sm:$0xff] %v3209
    // Predicated region
    $region34: #{decoder_forward.1} parent=1 // pred_check
      _
    $region35: #{decoder_forward.1} parent=1 // pred_check_branch
      %3218 = sbr.rel (0) target = $region37
    $region36: #{decoder_forward.1} parent=1 // pred_region
      %3220 = vsyncadd [#allocation9], 0
      %s3222 = sshll.u32 [#allocation12], 4
      %s3223 = int_to_ptr.vmem [resolvable:$true] %s3222
      %s3224 = sshll.u32 %s6, 4
      %s3225 = int_to_ptr.hbm [resolvable:$true] %s3224
      %3227 = dma.vmem_to_hbm [thread:$0]  %s3223, 896, %s3225, [#allocation9]
    $region37: #{decoder_forward.1} parent=1 // pred_fallthru
      _
    // Predicated region
    $region38: #{decoder_forward.1} parent=1 // pred_check
      _
    $region39: #{decoder_forward.1} parent=1 // pred_check_branch
      %3229 = sbr.rel (0) target = $region41
    $region40: #{decoder_forward.1} parent=1 // pred_region
      %3231 = dma.done [#allocation9], 896
    $region41: #{decoder_forward.1} parent=1 // pred_fallthru
      _
    %3232 = vsyncpa [#allocation8], 1
    %3233 = vsyncpa [#allocation11], 1
    %3234 = vsyncpa [#allocation9], 1
  %3235 = vsyncmov [#allocation6]
  %s3236 = vpop.sfrf %3235
  %p3237 = scmp.eq.s32.totalorder %s3236, 0
  %p3238 = pneg %p3237
  %3240 = shalt.err (%p3238)
  %s3241 = scalar_lea.sflag [#allocation6], 1
  %3242 = vsyncmov %s3241
  %s3243 = vpop.sfrf %3242
  %p3244 = scmp.eq.s32.totalorder %s3243, 0
  %p3245 = pneg %p3244
  %3247 = shalt.err (%p3245)
  %s3248 = scalar_lea.sflag [#allocation6], 2
  %3249 = vsyncmov %s3248
  %s3250 = vpop.sfrf %3249
  %p3251 = scmp.eq.s32.totalorder %s3250, 0
  %p3252 = pneg %p3251
  %3254 = shalt.err (%p3252)
  %s3255 = scalar_lea.sflag [#allocation6], 3
  %3256 = vsyncmov %s3255
  %s3257 = vpop.sfrf %3256
  %p3258 = scmp.eq.s32.totalorder %s3257, 0
  %p3259 = pneg %p3258
  %3261 = shalt.err (%p3259)

</llo_original>
